<compile_context>
chip_gen: v6e
topology: v6e:2x2x1
jax: 0.10.0
libtpu: 0.0.40
codegen_flags: <defaults>
</compile_context>

<pallas_src>
import math

import jax
import jax.numpy as jnp
from jax.experimental import pallas as pl
from jax.experimental.pallas import tpu as pltpu


# ----------------------------------------------------------------------------
# generation-aware VMEM budget
# ----------------------------------------------------------------------------
def _vmem_budget_bytes():
    phys = 64 * 1024 * 1024  # conservative fallback = v7x physical VMEM
    try:
        info = pltpu.get_tpu_info()
        cap = getattr(info, "vmem_capacity_bytes", None)
        if cap:
            phys = int(cap)
    except Exception:
        pass
    # leave headroom for Mosaic internal scratch; cap at 96 MiB on big-VMEM gens
    return min(int(phys * 0.65), 96 * 1024 * 1024)


_VMEM_BUDGET = _vmem_budget_bytes()
_DSEG_ROW_TILE = 512


# ----------------------------------------------------------------------------
# helpers
# ----------------------------------------------------------------------------
def _round_up(x, m):
    return ((x + m - 1) // m) * m


def _pad2d(x, rows, cols):
    r, c = x.shape
    if r == rows and c == cols:
        return x
    return jnp.zeros((rows, cols), x.dtype).at[:r, :c].set(x)


def _xavier_uniform(key, shape, dtype=jnp.float32):
    fan_in, fan_out = shape[-2], shape[-1]
    limit = math.sqrt(6.0 / (fan_in + fan_out))
    return jax.random.uniform(key, shape, dtype, minval=-limit, maxval=limit)


def _dseg_row_tiles(num_items):
    tm = min(_DSEG_ROW_TILE, _round_up(num_items, 16))  # 16-row bf16 sublane packing
    n_pad = _round_up(num_items, tm)
    return tm, n_pad


def _choose_prop_tiles(n_pad, d_pad, *, max_row_tile=1024):
    """Pick propagation tiling. Returns (tm, tk_or_None, pinned_E)."""
    budget = _VMEM_BUDGET
    if n_pad <= 256:
        tm = n_pad
    else:
        tm = min(max_row_tile, n_pad // 2)  # >=2 row tiles for v7x megacore
        while n_pad % tm != 0 or tm % 8 != 0:
            tm -= 8
    # double-buffered per-tile I/O (acc_in f32, acc_out f32, e_next bf16)
    io_bytes = 2 * (tm * d_pad * 4) + 2 * (tm * d_pad * 4) + 2 * (tm * d_pad * 2)

    # Path A: full E pinned in VMEM, single matmul per row tile (no k axis).
    pinned_bytes = 2 * (n_pad * d_pad * 2) + 2 * (tm * n_pad * 2) + io_bytes
    if pinned_bytes <= budget:
        return tm, None, True

    # Path B: k-tiled reduction with an f32 VMEM accumulator scratch.
    for tk in (2048, 1024, 512, 256, 128):
        if n_pad % tk != 0:
            continue
        tiled_bytes = (2 * (tm * tk * 2) + 2 * (tk * d_pad * 2)
                       + tm * d_pad * 4 + io_bytes)
        if tiled_bytes <= budget:
            return tm, tk, False
    return tm, 128, False


# ----------------------------------------------------------------------------
# Pallas kernels
# ----------------------------------------------------------------------------
def dseg_kernel(id_ref, cot_ref, wp_ref, bp_ref, wid_ref, wcot_ref, bf_ref,
                out_ref):
    """DSEG fusion for one row tile. bf16 matmul operands, f32 accumulation."""
    cot_p = jnp.dot(cot_ref[...], wp_ref[...],
                    preferred_element_type=jnp.float32) + bp_ref[...]
    cot_p = jnp.maximum(cot_p, 0.0)
    fused = (jnp.dot(id_ref[...], wid_ref[...],
                     preferred_element_type=jnp.float32)
             + jnp.dot(cot_p.astype(wcot_ref.dtype), wcot_ref[...],
                       preferred_element_type=jnp.float32)
             + bf_ref[...])
    out_ref[...] = jnp.tanh(fused).astype(out_ref.dtype)  # bf16 output


def prop_pinned_kernel(adj_ref, e_ref, acc_in_ref, e_next_ref, acc_out_ref):
    """E pinned in VMEM: one (tm, n_pad) @ (n_pad, d_pad) matmul per row tile.
    Fuses the layer-sum accumulation and the bf16 recast of E_next."""
    prod = jnp.dot(adj_ref[...], e_ref[...], preferred_element_type=jnp.float32)
    e_next_ref[...] = prod.astype(e_next_ref.dtype)
    acc_out_ref[...] = acc_in_ref[...] + prod


def prop_tiled_kernel(adj_ref, e_ref, acc_in_ref, e_next_ref, acc_out_ref,
                      acc_sc):
    """k-tiled E_next = A @ E with f32 VMEM accumulator, fused layer-sum output."""
    @pl.when(pl.program_id(1) == 0)
    def _():
        acc_sc[...] = jnp.zeros_like(acc_sc)

    acc_sc[...] += jnp.dot(adj_ref[...], e_ref[...],
                           preferred_element_type=jnp.float32)

    @pl.when(pl.program_id(1) == pl.num_programs(1) - 1)
    def _():
        e_next_ref[...] = acc_sc[...].astype(e_next_ref.dtype)
        acc_out_ref[...] = acc_in_ref[...] + acc_sc[...]


def score_kernel(u_ref, i_ref, out_ref):
    """Row-wise dot product; lane-dense layout: inputs (D, tile), output (1, tile)."""
    out_ref[...] = jnp.sum(u_ref[...] * i_ref[...], axis=0, keepdims=True)


# ----------------------------------------------------------------------------
# input preparation (hoisted out of the jitted forward — frozen tensors)
# ----------------------------------------------------------------------------
def prepare_adjacency(adj_norm):
    n = adj_norm.shape[0]
    n_pad = _round_up(n, 128)
    return _pad2d(adj_norm, n_pad, n_pad).astype(jnp.bfloat16)


def prepare_cot_embeddings(cot_embeds, num_items):
    _, n_pad = _dseg_row_tiles(num_items)
    c_pad = _round_up(cot_embeds.shape[1], 128)
    return _pad2d(cot_embeds, n_pad, c_pad).astype(jnp.bfloat16)


# ----------------------------------------------------------------------------
# Pallas wrappers
# ----------------------------------------------------------------------------
def dseg_forward(id_embeds, cot_prep, dseg_params):
    """Fused item embeddings: (N, D_id) x (N, C) -> (N, D_out) in bf16."""
    n, d = id_embeds.shape
    tm, n_pad = _dseg_row_tiles(n)
    d_pad = _round_up(d, 128)
    c_pad = cot_prep.shape[1]

    id_p = _pad2d(id_embeds.astype(jnp.bfloat16), n_pad, d_pad)
    wp = _pad2d(dseg_params["w_proj"].astype(jnp.bfloat16), c_pad, d_pad)
    bp = _pad2d(dseg_params["b_proj"], 1, d_pad)
    wid = _pad2d(dseg_params["w_fuse_id"].astype(jnp.bfloat16), d_pad, d_pad)
    wcot = _pad2d(dseg_params["w_fuse_cot"].astype(jnp.bfloat16), d_pad, d_pad)
    bf = _pad2d(dseg_params["b_fuse"], 1, d_pad)

    out = pl.pallas_call(
        dseg_kernel,
        out_shape=jax.ShapeDtypeStruct((n_pad, d_pad), jnp.bfloat16),
        grid_spec=pltpu.PrefetchScalarGridSpec(
            num_scalar_prefetch=0,
            grid=(n_pad // tm,),
            in_specs=[
                pl.BlockSpec((tm, d_pad), lambda i: (i, 0)),      # id rows (advance)
                pl.BlockSpec((tm, c_pad), lambda i: (i, 0)),      # cot rows (advance)
                pl.BlockSpec((c_pad, d_pad), lambda i: (0, 0)),   # W_proj (pinned)
                pl.BlockSpec((1, d_pad), lambda i: (0, 0)),       # b_proj (pinned)
                pl.BlockSpec((d_pad, d_pad), lambda i: (0, 0)),   # W_fuse_id (pinned)
                pl.BlockSpec((d_pad, d_pad), lambda i: (0, 0)),   # W_fuse_cot (pinned)
                pl.BlockSpec((1, d_pad), lambda i: (0, 0)),       # b_fuse (pinned)
            ],
            out_specs=pl.BlockSpec((tm, d_pad), lambda i: (i, 0)),
        ),
        compiler_params=pltpu.CompilerParams(
            dimension_semantics=("parallel",),
            vmem_limit_bytes=_VMEM_BUDGET,
        ),
    )(id_p, cot_prep, wp, bp, wid, wcot, bf)
    return out[:n, :d]


def _propagate_once(adj_prep, e_bf, acc, tm, tk, pinned, n_pad, d_pad):
    out_shapes = (jax.ShapeDtypeStruct((n_pad, d_pad), jnp.bfloat16),   # E_next
                  jax.ShapeDtypeStruct((n_pad, d_pad), jnp.float32))    # layer-sum
    if pinned:
        return pl.pallas_call(
            prop_pinned_kernel,
            out_shape=out_shapes,
            grid_spec=pltpu.PrefetchScalarGridSpec(
                num_scalar_prefetch=0,
                grid=(n_pad // tm,),
                in_specs=[
                    pl.BlockSpec((tm, n_pad), lambda i: (i, 0)),     # A row block
                    pl.BlockSpec((n_pad, d_pad), lambda i: (0, 0)),  # E pinned in VMEM
                    pl.BlockSpec((tm, d_pad), lambda i: (i, 0)),     # layer-sum in
                ],
                out_specs=[pl.BlockSpec((tm, d_pad), lambda i: (i, 0)),
                           pl.BlockSpec((tm, d_pad), lambda i: (i, 0))],
            ),
            compiler_params=pltpu.CompilerParams(
                dimension_semantics=("parallel",),
                vmem_limit_bytes=_VMEM_BUDGET,
            ),
        )(adj_prep, e_bf, acc)

    return pl.pallas_call(
        prop_tiled_kernel,
        out_shape=out_shapes,
        grid_spec=pltpu.PrefetchScalarGridSpec(
            num_scalar_prefetch=0,
            grid=(n_pad // tm, n_pad // tk),
            in_specs=[
                pl.BlockSpec((tm, tk), lambda i, k: (i, k)),       # A tile
                pl.BlockSpec((tk, d_pad), lambda i, k: (k, 0)),    # E tile
                pl.BlockSpec((tm, d_pad), lambda i, k: (i, 0)),    # layer-sum in
            ],
            out_specs=[pl.BlockSpec((tm, d_pad), lambda i, k: (i, 0)),
                       pl.BlockSpec((tm, d_pad), lambda i, k: (i, 0))],
            scratch_shapes=[pltpu.VMEM((tm, d_pad), jnp.float32)],
        ),
        compiler_params=pltpu.CompilerParams(
            dimension_semantics=("parallel", "arbitrary"),
            vmem_limit_bytes=_VMEM_BUDGET,
        ),
    )(adj_prep, e_bf, acc)


def lightgcn_forward(adj_prep, e0, num_layers):
    """Layer-averaged LightGCN propagation: mean_{l=0..L} A^l @ E0."""
    n, d = e0.shape
    n_pad = adj_prep.shape[0]
    d_pad = _round_up(d, 128)
    tm, tk, pinned = _choose_prop_tiles(n_pad, d_pad)

    e_bf = _pad2d(e0.astype(jnp.bfloat16), n_pad, d_pad)
    acc = _pad2d(e0, n_pad, d_pad)
    for _ in range(num_layers):
        e_bf, acc = _propagate_once(adj_prep, e_bf, acc, tm, tk, pinned,
                                    n_pad, d_pad)
    return (acc / float(num_layers + 1))[:n, :d]


def pairwise_scores(u_emb, i_emb, *, lane_tile=1024):
    """sum(u * i, axis=1) with lane-dense (1, tile) Pallas outputs, batch-tiled."""
    b, d = u_emb.shape
    d_pad = _round_up(d, 8)
    b_pad = _round_up(b, 128)
    lt = min(lane_tile, b_pad)
    while b_pad % lt != 0:
        lt -= 128
    u_t = _pad2d(u_emb.T, d_pad, b_pad)
    i_t = _pad2d(i_emb.T, d_pad, b_pad)
    out = pl.pallas_call(
        score_kernel,
        out_shape=jax.ShapeDtypeStruct((1, b_pad), jnp.float32),
        grid_spec=pltpu.PrefetchScalarGridSpec(
            num_scalar_prefetch=0,
            grid=(b_pad // lt,),
            in_specs=[pl.BlockSpec((d_pad, lt), lambda j: (0, j)),
                      pl.BlockSpec((d_pad, lt), lambda j: (0, j))],
            out_specs=pl.BlockSpec((1, lt), lambda j: (0, j)),
        ),
        compiler_params=pltpu.CompilerParams(
            dimension_semantics=("parallel",),
            vmem_limit_bytes=_VMEM_BUDGET,
        ),
    )(u_t, i_t)
    return out[0, :b]


# ----------------------------------------------------------------------------
# LGHRec model (forward, recommendation path)
# ----------------------------------------------------------------------------
def init_lghrec_params(key, num_users, num_items, gnn_dim, cot_dim):
    ks = jax.random.split(key, 7)
    return {
        "item_id_embeds": _xavier_uniform(ks[0], (num_items, gnn_dim)),
        "user_embeds": _xavier_uniform(ks[1], (num_users, gnn_dim)),
        "cot_embeds": jax.random.normal(ks[2], (num_items, cot_dim),
                                        jnp.float32),
        "dseg": {
            "w_proj": _xavier_uniform(ks[3], (cot_dim, gnn_dim)),
            "b_proj": jnp.zeros((1, gnn_dim), jnp.float32),
            "w_fuse_id": _xavier_uniform(ks[4], (gnn_dim, gnn_dim)),
            "w_fuse_cot": _xavier_uniform(ks[5], (gnn_dim, gnn_dim)),
            "b_fuse": jnp.zeros((1, gnn_dim), jnp.float32),
        },
    }


def build_normalized_adjacency(num_users, num_items, items_per_user=3):
    """Deterministic synthetic bipartite graph, D^-1/2 A D^-1/2 normalized."""
    n = num_users + num_items
    flat = jnp.arange(num_users * items_per_user)
    u_idx = flat // items_per_user
    i_idx = num_users + (flat % num_items)
    a = jnp.zeros((n, n), jnp.float32)
    a = a.at[u_idx, i_idx].set(1.0)
    a = a.at[i_idx, u_idx].set(1.0)
    deg = jnp.maximum(a.sum(axis=1), 1.0)
    dinv = 1.0 / jnp.sqrt(deg)
    return a * dinv[:, None] * dinv[None, :]


def lghrec_forward(params, adj_prep, cot_prep, num_users, num_items,
                   num_gnn_layers, user_idx, pos_item_idx, neg_item_idx=None):
    # 1) DSEG: fuse item-ID embeddings with CoT semantic embeddings (Pallas, bf16 out).
    fused_item_embeds = dseg_forward(params["item_id_embeds"], cot_prep,
                                     params["dseg"])

    # 2) LightGCN / SGL propagation over the whole graph (Pallas, fused layer-sum).
    e0 = jnp.concatenate(
        [params["user_embeds"], fused_item_embeds.astype(jnp.float32)], axis=0)
    e_final = lightgcn_forward(adj_prep, e0, num_gnn_layers)
    users_final = e_final[:num_users]
    items_final = e_final[num_users:]

    # 3) Gather batch embeddings (plain-JAX glue) and score (Pallas, lane-dense).
    u_b = jnp.take(users_final, user_idx, axis=0)
    i_pos = jnp.take(items_final, pos_item_idx, axis=0)
    pos_scores = pairwise_scores(u_b, i_pos)

    neg_scores = None
    i_neg = None
    if neg_item_idx is not None:
        i_neg = jnp.take(items_final, neg_item_idx, axis=0)
        neg_scores = pairwise_scores(u_b, i_neg)

    return pos_scores, neg_scores, (u_b, i_pos, i_neg)


# ----------------------------------------------------------------------------
# pure-JAX reference (f32) for validation
# ----------------------------------------------------------------------------
def _reference_forward(params, adj, num_users, num_items, num_layers,
                       user_idx, pos_idx, neg_idx):
    dseg = params["dseg"]
    cot_p = jnp.maximum(
        params["cot_embeds"] @ dseg["w_proj"] + dseg["b_proj"], 0.0)
    fused = jnp.tanh(params["item_id_embeds"] @ dseg["w_fuse_id"]
                     + cot_p @ dseg["w_fuse_cot"] + dseg["b_fuse"])
    e = jnp.concatenate([params["user_embeds"], fused], axis=0)
    acc = e
    for _ in range(num_layers):
        e = adj @ e
        acc = acc + e
    e_final = acc / float(num_layers + 1)
    u_b = e_final[:num_users][user_idx]
    i_p = e_final[num_users:][pos_idx]
    i_n = e_final[num_users:][neg_idx]
    return (u_b * i_p).sum(axis=1), (u_b * i_n).sum(axis=1)


# ----------------------------------------------------------------------------
if __name__ == "__main__":
    NUM_USERS = 8
    NUM_ITEMS = 16
    GNN_DIM = 32
    COT_DIM = 64
    GNN_LAYERS = 2
    BATCH = 4

    key = jax.random.PRNGKey(0)
    params = init_lghrec_params(key, NUM_USERS, NUM_ITEMS, GNN_DIM, COT_DIM)
    adj_norm = build_normalized_adjacency(NUM_USERS, NUM_ITEMS)

    # hoisted (frozen) preprocessing: cast/pad once, reuse across forward calls
    adj_prep = jax.block_until_ready(prepare_adjacency(adj_norm))
    cot_prep = jax.block_until_ready(
        prepare_cot_embeddings(params["cot_embeds"], NUM_ITEMS))

    k_u, k_p, k_n = jax.random.split(jax.random.PRNGKey(1), 3)
    user_idx = jax.random.randint(k_u, (BATCH,), 0, NUM_USERS)
    pos_idx = jax.random.randint(k_p, (BATCH,), 0, NUM_ITEMS)
    neg_idx = jax.random.randint(k_n, (BATCH,), 0, NUM_ITEMS)

    fwd = jax.jit(lghrec_forward, static_argnums=(3, 4, 5))
    pos_scores, neg_scores, (u_e, pi_e, ni_e) = fwd(
        params, adj_prep, cot_prep, NUM_USERS, NUM_ITEMS, GNN_LAYERS,
        user_idx, pos_idx, neg_idx)
    jax.block_until_ready((pos_scores, neg_scores, u_e, pi_e, ni_e))

    # shape checks
    assert pos_scores.shape == (BATCH,)
    assert neg_scores.shape == (BATCH,)
    assert u_e.shape == (BATCH, GNN_DIM)
    assert pi_e.shape == (BATCH, GNN_DIM)
    assert ni_e.shape == (BATCH, GNN_DIM)

    # numerical check vs f32 reference (kernels use bf16 operands -> loose tol)
    ref_pos, ref_neg = _reference_forward(params, adj_norm, NUM_USERS,
                                          NUM_ITEMS, GNN_LAYERS,
                                          user_idx, pos_idx, neg_idx)
    assert bool(jnp.allclose(pos_scores, ref_pos, atol=2e-2, rtol=5e-2))
    assert bool(jnp.allclose(neg_scores, ref_neg, atol=2e-2, rtol=5e-2))

    print("KERNEL_OK")
</pallas_src>

<mosaic_0001>
module attributes {stable_mosaic.version = 11 : i64} {
  func.func @dseg_kernel(%arg0: i32, %arg1: memref<16x128xbf16, #tpu.memory_space<vmem>>, %arg2: memref<16x128xbf16, #tpu.memory_space<vmem>>, %arg3: memref<128x128xbf16, #tpu.memory_space<vmem>>, %arg4: memref<1x128xf32, #tpu.memory_space<vmem>>, %arg5: memref<128x128xbf16, #tpu.memory_space<vmem>>, %arg6: memref<128x128xbf16, #tpu.memory_space<vmem>>, %arg7: memref<1x128xf32, #tpu.memory_space<vmem>>, %arg8: memref<16x128xbf16, #tpu.memory_space<vmem>>) attributes {dimension_semantics = [#tpu.dimension_semantics<parallel>], iteration_bounds = array<i64: 1>, scalar_prefetch = 0 : i64, scratch_operands = 0 : i64, tpu.core_type = #tpu.core_type<tc>, window_params = [{transform_indices = @transform_0, window_bounds = array<i64: 16, 128>}, {transform_indices = @transform_1, window_bounds = array<i64: 16, 128>}, {pipeline_mode = #tpu.pipeline_mode<synchronous>, transform_indices = @transform_2, window_bounds = array<i64: 128, 128>}, {pipeline_mode = #tpu.pipeline_mode<synchronous>, transform_indices = @transform_3, window_bounds = array<i64: 1, 128>}, {pipeline_mode = #tpu.pipeline_mode<synchronous>, transform_indices = @transform_4, window_bounds = array<i64: 128, 128>}, {pipeline_mode = #tpu.pipeline_mode<synchronous>, transform_indices = @transform_5, window_bounds = array<i64: 128, 128>}, {pipeline_mode = #tpu.pipeline_mode<synchronous>, transform_indices = @transform_6, window_bounds = array<i64: 1, 128>}, {transform_indices = @transform_7, window_bounds = array<i64: 16, 128>}]} {
    %c0 = arith.constant 0 : index
    %c0_0 = arith.constant 0 : index
    %0 = vector.load %arg2[%c0, %c0_0] : memref<16x128xbf16, #tpu.memory_space<vmem>>, vector<16x128xbf16>
    %c0_1 = arith.constant 0 : index
    %c0_2 = arith.constant 0 : index
    %1 = vector.load %arg3[%c0_1, %c0_2] : memref<128x128xbf16, #tpu.memory_space<vmem>>, vector<128x128xbf16>
    %cst = arith.constant dense<0.000000e+00> : vector<16x128xf32>
    %2 = tpu.matmul %0, %1, %cst {dimension_numbers = #tpu.dot_dimension_numbers<[1], [0], [0], [1], [0, 0, 1, 1], [], []>} : vector<16x128xbf16>, vector<128x128xbf16>, vector<16x128xf32> -> vector<16x128xf32>
    %c0_3 = arith.constant 0 : index
    %c0_4 = arith.constant 0 : index
    %3 = vector.load %arg4[%c0_3, %c0_4] : memref<1x128xf32, #tpu.memory_space<vmem>>, vector<1x128xf32>
    %4 = vector.broadcast %3 : vector<1x128xf32> to vector<16x128xf32>
    %5 = arith.addf %2, %4 : vector<16x128xf32>
    %cst_5 = arith.constant 0.000000e+00 : f32
    %6 = vector.broadcast %cst_5 : f32 to vector<16x128xf32>
    %7 = arith.maximumf %5, %6 : vector<16x128xf32>
    %c0_6 = arith.constant 0 : index
    %c0_7 = arith.constant 0 : index
    %8 = vector.load %arg1[%c0_6, %c0_7] : memref<16x128xbf16, #tpu.memory_space<vmem>>, vector<16x128xbf16>
    %c0_8 = arith.constant 0 : index
    %c0_9 = arith.constant 0 : index
    %9 = vector.load %arg5[%c0_8, %c0_9] : memref<128x128xbf16, #tpu.memory_space<vmem>>, vector<128x128xbf16>
    %cst_10 = arith.constant dense<0.000000e+00> : vector<16x128xf32>
    %10 = tpu.matmul %8, %9, %cst_10 {dimension_numbers = #tpu.dot_dimension_numbers<[1], [0], [0], [1], [0, 0, 1, 1], [], []>} : vector<16x128xbf16>, vector<128x128xbf16>, vector<16x128xf32> -> vector<16x128xf32>
    %11 = arith.truncf %7 : vector<16x128xf32> to vector<16x128xbf16>
    %c0_11 = arith.constant 0 : index
    %c0_12 = arith.constant 0 : index
    %12 = vector.load %arg6[%c0_11, %c0_12] : memref<128x128xbf16, #tpu.memory_space<vmem>>, vector<128x128xbf16>
    %cst_13 = arith.constant dense<0.000000e+00> : vector<16x128xf32>
    %13 = tpu.matmul %11, %12, %cst_13 {dimension_numbers = #tpu.dot_dimension_numbers<[1], [0], [0], [1], [0, 0, 1, 1], [], []>} : vector<16x128xbf16>, vector<128x128xbf16>, vector<16x128xf32> -> vector<16x128xf32>
    %14 = arith.addf %10, %13 : vector<16x128xf32>
    %c0_14 = arith.constant 0 : index
    %c0_15 = arith.constant 0 : index
    %15 = vector.load %arg7[%c0_14, %c0_15] : memref<1x128xf32, #tpu.memory_space<vmem>>, vector<1x128xf32>
    %16 = vector.broadcast %15 : vector<1x128xf32> to vector<16x128xf32>
    %17 = arith.addf %14, %16 : vector<16x128xf32>
    %18 = math.tanh %17 : vector<16x128xf32>
    %19 = arith.truncf %18 : vector<16x128xf32> to vector<16x128xbf16>
    %c0_16 = arith.constant 0 : index
    %c0_17 = arith.constant 0 : index
    %20 = vector.load %arg8[%c0_16, %c0_17] : memref<16x128xbf16, #tpu.memory_space<vmem>>, vector<16x128xbf16>
    tpu.vector_store %arg8[%c0_16, %c0_17], %19 {strides = array<i32>} : memref<16x128xbf16, #tpu.memory_space<vmem>>, vector<16x128xbf16>,
    return
  }
  func.func @transform_0(%arg0: i32) -> (i32, i32) {
    %c0_i32 = arith.constant 0 : i32
    %c0_i32_0 = arith.constant 0 : i32
    return %arg0, %c0_i32 : i32, i32
  }
  func.func @transform_1(%arg0: i32) -> (i32, i32) {
    %c0_i32 = arith.constant 0 : i32
    %c0_i32_0 = arith.constant 0 : i32
    return %arg0, %c0_i32 : i32, i32
  }
  func.func @transform_2(%arg0: i32) -> (i32, i32) {
    %c0_i32 = arith.constant 0 : i32
    %c0_i32_0 = arith.constant 0 : i32
    %c0_i32_1 = arith.constant 0 : i32
    return %c0_i32, %c0_i32_0 : i32, i32
  }
  func.func @transform_3(%arg0: i32) -> (i32, i32) {
    %c0_i32 = arith.constant 0 : i32
    %c0_i32_0 = arith.constant 0 : i32
    %c0_i32_1 = arith.constant 0 : i32
    return %c0_i32, %c0_i32_0 : i32, i32
  }
  func.func @transform_4(%arg0: i32) -> (i32, i32) {
    %c0_i32 = arith.constant 0 : i32
    %c0_i32_0 = arith.constant 0 : i32
    %c0_i32_1 = arith.constant 0 : i32
    return %c0_i32, %c0_i32_0 : i32, i32
  }
  func.func @transform_5(%arg0: i32) -> (i32, i32) {
    %c0_i32 = arith.constant 0 : i32
    %c0_i32_0 = arith.constant 0 : i32
    %c0_i32_1 = arith.constant 0 : i32
    return %c0_i32, %c0_i32_0 : i32, i32
  }
  func.func @transform_6(%arg0: i32) -> (i32, i32) {
    %c0_i32 = arith.constant 0 : i32
    %c0_i32_0 = arith.constant 0 : i32
    %c0_i32_1 = arith.constant 0 : i32
    return %c0_i32, %c0_i32_0 : i32, i32
  }
  func.func @transform_7(%arg0: i32) -> (i32, i32) {
    %c0_i32 = arith.constant 0 : i32
    %c0_i32_0 = arith.constant 0 : i32
    return %arg0, %c0_i32 : i32, i32
  }
}

module attributes {stable_mosaic.version = 11 : i64} {
  func.func @prop_pinned_kernel(%arg0: i32, %arg1: memref<128x128xbf16, #tpu.memory_space<vmem>>, %arg2: memref<128x128xbf16, #tpu.memory_space<vmem>>, %arg3: memref<128x128xf32, #tpu.memory_space<vmem>>, %arg4: memref<128x128xbf16, #tpu.memory_space<vmem>>, %arg5: memref<128x128xf32, #tpu.memory_space<vmem>>) attributes {dimension_semantics = [#tpu.dimension_semantics<parallel>], iteration_bounds = array<i64: 1>, scalar_prefetch = 0 : i64, scratch_operands = 0 : i64, tpu.core_type = #tpu.core_type<tc>, window_params = [{transform_indices = @transform_0, window_bounds = array<i64: 128, 128>}, {pipeline_mode = #tpu.pipeline_mode<synchronous>, transform_indices = @transform_1, window_bounds = array<i64: 128, 128>}, {transform_indices = @transform_2, window_bounds = array<i64: 128, 128>}, {transform_indices = @transform_3, window_bounds = array<i64: 128, 128>}, {transform_indices = @transform_4, window_bounds = array<i64: 128, 128>}]} {
    %c0 = arith.constant 0 : index
    %c0_0 = arith.constant 0 : index
    %0 = vector.load %arg1[%c0, %c0_0] : memref<128x128xbf16, #tpu.memory_space<vmem>>, vector<128x128xbf16>
    %c0_1 = arith.constant 0 : index
    %c0_2 = arith.constant 0 : index
    %1 = vector.load %arg2[%c0_1, %c0_2] : memref<128x128xbf16, #tpu.memory_space<vmem>>, vector<128x128xbf16>
    %cst = arith.constant dense<0.000000e+00> : vector<128x128xf32>
    %2 = tpu.matmul %0, %1, %cst {dimension_numbers = #tpu.dot_dimension_numbers<[1], [0], [0], [1], [0, 0, 1, 1], [], []>} : vector<128x128xbf16>, vector<128x128xbf16>, vector<128x128xf32> -> vector<128x128xf32>
    %3 = arith.truncf %2 : vector<128x128xf32> to vector<128x128xbf16>
    %c0_3 = arith.constant 0 : index
    %c0_4 = arith.constant 0 : index
    %4 = vector.load %arg4[%c0_3, %c0_4] : memref<128x128xbf16, #tpu.memory_space<vmem>>, vector<128x128xbf16>
    tpu.vector_store %arg4[%c0_3, %c0_4], %3 {strides = array<i32>} : memref<128x128xbf16, #tpu.memory_space<vmem>>, vector<128x128xbf16>,
    %c0_5 = arith.constant 0 : index
    %c0_6 = arith.constant 0 : index
    %5 = vector.load %arg3[%c0_5, %c0_6] : memref<128x128xf32, #tpu.memory_space<vmem>>, vector<128x128xf32>
    %6 = arith.addf %5, %2 : vector<128x128xf32>
    %c0_7 = arith.constant 0 : index
    %c0_8 = arith.constant 0 : index
    %7 = vector.load %arg5[%c0_7, %c0_8] : memref<128x128xf32, #tpu.memory_space<vmem>>, vector<128x128xf32>
    tpu.vector_store %arg5[%c0_7, %c0_8], %6 {strides = array<i32>} : memref<128x128xf32, #tpu.memory_space<vmem>>, vector<128x128xf32>,
    return
  }
  func.func @transform_0(%arg0: i32) -> (i32, i32) {
    %c0_i32 = arith.constant 0 : i32
    %c0_i32_0 = arith.constant 0 : i32
    return %arg0, %c0_i32 : i32, i32
  }
  func.func @transform_1(%arg0: i32) -> (i32, i32) {
    %c0_i32 = arith.constant 0 : i32
    %c0_i32_0 = arith.constant 0 : i32
    %c0_i32_1 = arith.constant 0 : i32
    return %c0_i32, %c0_i32_0 : i32, i32
  }
  func.func @transform_2(%arg0: i32) -> (i32, i32) {
    %c0_i32 = arith.constant 0 : i32
    %c0_i32_0 = arith.constant 0 : i32
    return %arg0, %c0_i32 : i32, i32
  }
  func.func @transform_3(%arg0: i32) -> (i32, i32) {
    %c0_i32 = arith.constant 0 : i32
    %c0_i32_0 = arith.constant 0 : i32
    return %arg0, %c0_i32 : i32, i32
  }
  func.func @transform_4(%arg0: i32) -> (i32, i32) {
    %c0_i32 = arith.constant 0 : i32
    %c0_i32_0 = arith.constant 0 : i32
    return %arg0, %c0_i32 : i32, i32
  }
}

module attributes {stable_mosaic.version = 11 : i64} {
  func.func @prop_pinned_kernel(%arg0: i32, %arg1: memref<128x128xbf16, #tpu.memory_space<vmem>>, %arg2: memref<128x128xbf16, #tpu.memory_space<vmem>>, %arg3: memref<128x128xf32, #tpu.memory_space<vmem>>, %arg4: memref<128x128xbf16, #tpu.memory_space<vmem>>, %arg5: memref<128x128xf32, #tpu.memory_space<vmem>>) attributes {dimension_semantics = [#tpu.dimension_semantics<parallel>], iteration_bounds = array<i64: 1>, scalar_prefetch = 0 : i64, scratch_operands = 0 : i64, tpu.core_type = #tpu.core_type<tc>, window_params = [{transform_indices = @transform_0, window_bounds = array<i64: 128, 128>}, {pipeline_mode = #tpu.pipeline_mode<synchronous>, transform_indices = @transform_1, window_bounds = array<i64: 128, 128>}, {transform_indices = @transform_2, window_bounds = array<i64: 128, 128>}, {transform_indices = @transform_3, window_bounds = array<i64: 128, 128>}, {transform_indices = @transform_4, window_bounds = array<i64: 128, 128>}]} {
    %c0 = arith.constant 0 : index
    %c0_0 = arith.constant 0 : index
    %0 = vector.load %arg1[%c0, %c0_0] : memref<128x128xbf16, #tpu.memory_space<vmem>>, vector<128x128xbf16>
    %c0_1 = arith.constant 0 : index
    %c0_2 = arith.constant 0 : index
    %1 = vector.load %arg2[%c0_1, %c0_2] : memref<128x128xbf16, #tpu.memory_space<vmem>>, vector<128x128xbf16>
    %cst = arith.constant dense<0.000000e+00> : vector<128x128xf32>
    %2 = tpu.matmul %0, %1, %cst {dimension_numbers = #tpu.dot_dimension_numbers<[1], [0], [0], [1], [0, 0, 1, 1], [], []>} : vector<128x128xbf16>, vector<128x128xbf16>, vector<128x128xf32> -> vector<128x128xf32>
    %3 = arith.truncf %2 : vector<128x128xf32> to vector<128x128xbf16>
    %c0_3 = arith.constant 0 : index
    %c0_4 = arith.constant 0 : index
    %4 = vector.load %arg4[%c0_3, %c0_4] : memref<128x128xbf16, #tpu.memory_space<vmem>>, vector<128x128xbf16>
    tpu.vector_store %arg4[%c0_3, %c0_4], %3 {strides = array<i32>} : memref<128x128xbf16, #tpu.memory_space<vmem>>, vector<128x128xbf16>,
    %c0_5 = arith.constant 0 : index
    %c0_6 = arith.constant 0 : index
    %5 = vector.load %arg3[%c0_5, %c0_6] : memref<128x128xf32, #tpu.memory_space<vmem>>, vector<128x128xf32>
    %6 = arith.addf %5, %2 : vector<128x128xf32>
    %c0_7 = arith.constant 0 : index
    %c0_8 = arith.constant 0 : index
    %7 = vector.load %arg5[%c0_7, %c0_8] : memref<128x128xf32, #tpu.memory_space<vmem>>, vector<128x128xf32>
    tpu.vector_store %arg5[%c0_7, %c0_8], %6 {strides = array<i32>} : memref<128x128xf32, #tpu.memory_space<vmem>>, vector<128x128xf32>,
    return
  }
  func.func @transform_0(%arg0: i32) -> (i32, i32) {
    %c0_i32 = arith.constant 0 : i32
    %c0_i32_0 = arith.constant 0 : i32
    return %arg0, %c0_i32 : i32, i32
  }
  func.func @transform_1(%arg0: i32) -> (i32, i32) {
    %c0_i32 = arith.constant 0 : i32
    %c0_i32_0 = arith.constant 0 : i32
    %c0_i32_1 = arith.constant 0 : i32
    return %c0_i32, %c0_i32_0 : i32, i32
  }
  func.func @transform_2(%arg0: i32) -> (i32, i32) {
    %c0_i32 = arith.constant 0 : i32
    %c0_i32_0 = arith.constant 0 : i32
    return %arg0, %c0_i32 : i32, i32
  }
  func.func @transform_3(%arg0: i32) -> (i32, i32) {
    %c0_i32 = arith.constant 0 : i32
    %c0_i32_0 = arith.constant 0 : i32
    return %arg0, %c0_i32 : i32, i32
  }
  func.func @transform_4(%arg0: i32) -> (i32, i32) {
    %c0_i32 = arith.constant 0 : i32
    %c0_i32_0 = arith.constant 0 : i32
    return %arg0, %c0_i32 : i32, i32
  }
}

module attributes {stable_mosaic.version = 11 : i64} {
  func.func @score_kernel(%arg0: i32, %arg1: memref<32x128xf32, #tpu.memory_space<vmem>>, %arg2: memref<32x128xf32, #tpu.memory_space<vmem>>, %arg3: memref<1x128xf32, #tpu.memory_space<vmem>>) attributes {dimension_semantics = [#tpu.dimension_semantics<parallel>], iteration_bounds = array<i64: 1>, scalar_prefetch = 0 : i64, scratch_operands = 0 : i64, tpu.core_type = #tpu.core_type<tc>, window_params = [{transform_indices = @transform_0, window_bounds = array<i64: 32, 128>}, {transform_indices = @transform_1, window_bounds = array<i64: 32, 128>}, {transform_indices = @transform_2, window_bounds = array<i64: 1, 128>}]} {
    %c0 = arith.constant 0 : index
    %c0_0 = arith.constant 0 : index
    %0 = vector.load %arg1[%c0, %c0_0] : memref<32x128xf32, #tpu.memory_space<vmem>>, vector<32x128xf32>
    %c0_1 = arith.constant 0 : index
    %c0_2 = arith.constant 0 : index
    %1 = vector.load %arg2[%c0_1, %c0_2] : memref<32x128xf32, #tpu.memory_space<vmem>>, vector<32x128xf32>
    %2 = arith.mulf %0, %1 : vector<32x128xf32>
    %cst = arith.constant dense<0.000000e+00> : vector<128xf32>
    %3 = vector.multi_reduction <add>, %2, %cst [0] : vector<32x128xf32> to vector<128xf32>
    %4 = vector.shape_cast %3 : vector<128xf32> to vector<1x128xf32>
    %c0_3 = arith.constant 0 : index
    %c0_4 = arith.constant 0 : index
    %5 = vector.load %arg3[%c0_3, %c0_4] : memref<1x128xf32, #tpu.memory_space<vmem>>, vector<1x128xf32>
    tpu.vector_store %arg3[%c0_3, %c0_4], %4 {strides = array<i32>} : memref<1x128xf32, #tpu.memory_space<vmem>>, vector<1x128xf32>,
    return
  }
  func.func @transform_0(%arg0: i32) -> (i32, i32) {
    %c0_i32 = arith.constant 0 : i32
    %c0_i32_0 = arith.constant 0 : i32
    return %c0_i32, %arg0 : i32, i32
  }
  func.func @transform_1(%arg0: i32) -> (i32, i32) {
    %c0_i32 = arith.constant 0 : i32
    %c0_i32_0 = arith.constant 0 : i32
    return %c0_i32, %arg0 : i32, i32
  }
  func.func @transform_2(%arg0: i32) -> (i32, i32) {
    %c0_i32 = arith.constant 0 : i32
    %c0_i32_0 = arith.constant 0 : i32
    return %c0_i32, %arg0 : i32, i32
  }
}

</mosaic_0001>

<llo_original>
// kernel: lghrec_forward.5
$region0: #{lghrec_forward.5}
  #allocation0 [shape = 'u32[]', space=smem, size = 0x4, offset = 0x4, fixed_abs, tag = 'smem constant byte address 0x4 - core index']
  #allocation1 [shape = 'u32[144,128]{1,0:T(1,128)}', space=vmem, size = 0x12000, scoped, tag = 'internal scratch']
  %s0 = inlined_call_operand.vmem [shape: bf16[16,128], index: 0, kind: input, shape index: {}]
  %s1 = inlined_call_operand.vmem [shape: bf16[16,128], index: 1, kind: input, shape index: {}]
  %s2 = inlined_call_operand.vmem [shape: bf16[128,128], index: 2, kind: input, shape index: {}]
  %s3 = inlined_call_operand.vmem [shape: f32[1,128], index: 3, kind: input, shape index: {}]
  %s4 = inlined_call_operand.vmem [shape: bf16[128,128], index: 4, kind: input, shape index: {}]
  %s5 = inlined_call_operand.vmem [shape: bf16[128,128], index: 5, kind: input, shape index: {}]
  %s6 = inlined_call_operand.vmem [shape: f32[1,128], index: 6, kind: input, shape index: {}]
  %s7 = inlined_call_operand.vmem [shape: bf16[16,128], index: 7, kind: output, shape index: {}]
  %s8 = sld [smem:[#allocation0]]
  $region38: #{lghrec_forward.5} parent=0
    _
  %s10 = ssub.s32 1, %s8
  %s11 = scalar_select 0, %s10, %s8
  // Predicated region
  $region2: #{lghrec_forward.5} parent=0 // pred_check
    _
  $region3: #{lghrec_forward.5} parent=0 // pred_check_branch
    %13 = sbr.rel (0) target = $region5
  $region4: #{lghrec_forward.5} parent=0 // pred_region
    _
  $region5: #{lghrec_forward.5} parent=0 // pred_fallthru
    _
  // Predicated region
  $region6: #{lghrec_forward.5} parent=0 // pred_check
    _
  $region7: #{lghrec_forward.5} parent=0 // pred_check_branch
    %15 = sbr.rel (0) target = $region9
  $region8: #{lghrec_forward.5} parent=0 // pred_region
    _
  $region9: #{lghrec_forward.5} parent=0 // pred_fallthru
    _
  // Predicated region
  $region10: #{lghrec_forward.5} parent=0 // pred_check
    _
  $region11: #{lghrec_forward.5} parent=0 // pred_check_branch
    %17 = sbr.rel (0) target = $region13
  $region12: #{lghrec_forward.5} parent=0 // pred_region
    _
  $region13: #{lghrec_forward.5} parent=0 // pred_fallthru
    _
  // Predicated region
  $region14: #{lghrec_forward.5} parent=0 // pred_check
    _
  $region15: #{lghrec_forward.5} parent=0 // pred_check_branch
    %19 = sbr.rel (0) target = $region17
  $region16: #{lghrec_forward.5} parent=0 // pred_region
    _
  $region17: #{lghrec_forward.5} parent=0 // pred_fallthru
    _
  // Predicated region
  $region18: #{lghrec_forward.5} parent=0 // pred_check
    _
  $region19: #{lghrec_forward.5} parent=0 // pred_check_branch
    %21 = sbr.rel (0) target = $region21
  $region20: #{lghrec_forward.5} parent=0 // pred_region
    _
  $region21: #{lghrec_forward.5} parent=0 // pred_fallthru
    _
  // Predicated region
  $region22: #{lghrec_forward.5} parent=0 // pred_check
    _
  $region23: #{lghrec_forward.5} parent=0 // pred_check_branch
    %23 = sbr.rel (0) target = $region25
  $region24: #{lghrec_forward.5} parent=0 // pred_region
    _
  $region25: #{lghrec_forward.5} parent=0 // pred_fallthru
    _
  // Predicated region
  $region26: #{lghrec_forward.5} parent=0 // pred_check
    _
  $region27: #{lghrec_forward.5} parent=0 // pred_check_branch
    %25 = sbr.rel (0) target = $region29
  $region28: #{lghrec_forward.5} parent=0 // pred_region
    _
  $region29: #{lghrec_forward.5} parent=0 // pred_fallthru
    _
  %v27 = vld [vmem:[%s1] sm:$0xf]
  %v28 = vld [vmem:[%s1 + $0x4] sm:$0xf]
  %v29 = vld [vmem:[%s2] sm:$0xf]
  %v30 = vld [vmem:[%s2 + $0x4] sm:$0xf]
  %v31 = vld [vmem:[%s2 + $0x8] sm:$0xf]
  %v32 = vld [vmem:[%s2 + $0xc] sm:$0xf]
  %v33 = vld [vmem:[%s2 + $0x10] sm:$0xf]
  %v34 = vld [vmem:[%s2 + $0x14] sm:$0xf]
  %v35 = vld [vmem:[%s2 + $0x18] sm:$0xf]
  %v36 = vld [vmem:[%s2 + $0x1c] sm:$0xf]
  %v37 = vld [vmem:[%s2 + $0x20] sm:$0xf]
  %v38 = vld [vmem:[%s2 + $0x24] sm:$0xf]
  %v39 = vld [vmem:[%s2 + $0x28] sm:$0xf]
  %v40 = vld [vmem:[%s2 + $0x2c] sm:$0xf]
  %v41 = vld [vmem:[%s2 + $0x30] sm:$0xf]
  %v42 = vld [vmem:[%s2 + $0x34] sm:$0xf]
  %v43 = vld [vmem:[%s2 + $0x38] sm:$0xf]
  %v44 = vld [vmem:[%s2 + $0x3c] sm:$0xf]
  %v45 = vld [vmem:[%s3] sm:$0x1]
  %v47 = vlaneseq
  %v48 = vshrl.u32 %v47, 7
  %v49 = vsub.s32 0, %v48
  %v50 = vrot.slane %v45, %v49
  %v54 = vunpack.c.l.b16 %v27
  %v55 = vunpack.c.l.b16 %v28
  %v56 = vpack.c.b16 %v55, %v54
  %v74 = vunpack.c.l.b16 %v29
  %v75 = vunpack.c.l.b16 %v30
  %v76 = vunpack.c.l.b16 %v31
  %v77 = vunpack.c.l.b16 %v32
  %v78 = vunpack.c.l.b16 %v33
  %v79 = vunpack.c.l.b16 %v34
  %v80 = vunpack.c.l.b16 %v35
  %v81 = vunpack.c.l.b16 %v36
  %v82 = vunpack.c.l.b16 %v37
  %v83 = vunpack.c.l.b16 %v38
  %v84 = vunpack.c.l.b16 %v39
  %v85 = vunpack.c.l.b16 %v40
  %v86 = vunpack.c.l.b16 %v41
  %v87 = vunpack.c.l.b16 %v42
  %v88 = vunpack.c.l.b16 %v43
  %v89 = vunpack.c.l.b16 %v44
  %v90 = vpack.c.b16 %v75, %v74
  %v91 = vpack.c.b16 %v77, %v76
  %v92 = vpack.c.b16 %v79, %v78
  %v93 = vpack.c.b16 %v81, %v80
  %v94 = vpack.c.b16 %v83, %v82
  %v95 = vpack.c.b16 %v85, %v84
  %v96 = vpack.c.b16 %v87, %v86
  %v97 = vpack.c.b16 %v89, %v88
  %106 = vmatprep.subr.bf16.mxu0 0
  %107 = vmatpush1.bf16.msra.mxu0 %v97
  %108 = vmatprep.subr.bf16.mxu0 0
  %109 = vmatpush1.bf16.msra.mxu0 %v96
  %110 = vmatprep.subr.bf16.mxu0 0
  %111 = vmatpush1.bf16.msra.mxu0 %v95
  %112 = vmatprep.subr.bf16.mxu0 0
  %113 = vmatpush1.bf16.msra.mxu0 %v94
  %114 = vmatprep.subr.bf16.mxu0 0
  %115 = vmatpush1.bf16.msra.mxu0 %v93
  %116 = vmatprep.subr.bf16.mxu0 0
  %117 = vmatpush1.bf16.msra.mxu0 %v92
  %118 = vmatprep.subr.bf16.mxu0 0
  %119 = vmatpush1.bf16.msra.mxu0 %v91
  %120 = vmatprep.subr.bf16.mxu0 0
  %121 = vmatpush1.bf16.msra.mxu0 %v90
  %122 = vmatprep.subr.bf16.mxu0 0
  %123 = vmatpush2.bf16.msra.mxu0 0
  %124 = vmatprep.subr.bf16.mxu0 0
  %125 = vmatpush2.bf16.msra.mxu0 0
  %126 = vmatprep.subr.bf16.mxu0 0
  %127 = vmatpush2.bf16.msra.mxu0 0
  %128 = vmatprep.subr.bf16.mxu0 0
  %129 = vmatpush2.bf16.msra.mxu0 0
  %130 = vmatprep.subr.bf16.mxu0 0
  %131 = vmatpush2.bf16.msra.mxu0 0
  %132 = vmatprep.subr.bf16.mxu0 0
  %133 = vmatpush2.bf16.msra.mxu0 0
  %134 = vmatprep.subr.bf16.mxu0 0
  %135 = vmatpush2.bf16.msra.mxu0 0
  %136 = vmatprep.subr.bf16.mxu0 0
  %137 = vmatpush2.bf16.msra.mxu0 0
  %138 = vmatprep.mubr.bf16.mxu0 0
  %139 = vmatmul.mubr.bf16.gmra.mxu0 %v56
  %v140 = vpop.f32.mrf.mxu0
  %v141 = vadd.f32 %v50, %v140
  %v142 = vpop.f32.mrf.mxu0
  %v143 = vpop.f32.mrf.mxu0
  %v144 = vadd.f32 %v50, %v143
  %v145 = vpop.f32.mrf.mxu0
  %146 = vdwg.mxu0
  %v147 = vmax.f32 %v141, 0.0
  %v148 = vmax.f32 %v144, 0.0
  %v149 = vld [vmem:[%s0] sm:$0xf]
  %v150 = vld [vmem:[%s0 + $0x4] sm:$0xf]
  %v151 = vld [vmem:[%s4] sm:$0xf]
  %v152 = vld [vmem:[%s4 + $0x4] sm:$0xf]
  %v153 = vld [vmem:[%s4 + $0x8] sm:$0xf]
  %v154 = vld [vmem:[%s4 + $0xc] sm:$0xf]
  %v155 = vld [vmem:[%s4 + $0x10] sm:$0xf]
  %v156 = vld [vmem:[%s4 + $0x14] sm:$0xf]
  %v157 = vld [vmem:[%s4 + $0x18] sm:$0xf]
  %v158 = vld [vmem:[%s4 + $0x1c] sm:$0xf]
  %v159 = vld [vmem:[%s4 + $0x20] sm:$0xf]
  %v160 = vld [vmem:[%s4 + $0x24] sm:$0xf]
  %v161 = vld [vmem:[%s4 + $0x28] sm:$0xf]
  %v162 = vld [vmem:[%s4 + $0x2c] sm:$0xf]
  %v163 = vld [vmem:[%s4 + $0x30] sm:$0xf]
  %v164 = vld [vmem:[%s4 + $0x34] sm:$0xf]
  %v165 = vld [vmem:[%s4 + $0x38] sm:$0xf]
  %v166 = vld [vmem:[%s4 + $0x3c] sm:$0xf]
  %v167 = vpack.c.bf16 %v148, %v147
  %v168 = vld [vmem:[%s5] sm:$0xf]
  %v169 = vld [vmem:[%s5 + $0x4] sm:$0xf]
  %v170 = vld [vmem:[%s5 + $0x8] sm:$0xf]
  %v171 = vld [vmem:[%s5 + $0xc] sm:$0xf]
  %v172 = vld [vmem:[%s5 + $0x10] sm:$0xf]
  %v173 = vld [vmem:[%s5 + $0x14] sm:$0xf]
  %v174 = vld [vmem:[%s5 + $0x18] sm:$0xf]
  %v175 = vld [vmem:[%s5 + $0x1c] sm:$0xf]
  %v176 = vld [vmem:[%s5 + $0x20] sm:$0xf]
  %v177 = vld [vmem:[%s5 + $0x24] sm:$0xf]
  %v178 = vld [vmem:[%s5 + $0x28] sm:$0xf]
  %v179 = vld [vmem:[%s5 + $0x2c] sm:$0xf]
  %v180 = vld [vmem:[%s5 + $0x30] sm:$0xf]
  %v181 = vld [vmem:[%s5 + $0x34] sm:$0xf]
  %v182 = vld [vmem:[%s5 + $0x38] sm:$0xf]
  %v183 = vld [vmem:[%s5 + $0x3c] sm:$0xf]
  %v200 = vunpack.c.l.b16 %v168
  %v201 = vunpack.c.l.b16 %v169
  %v202 = vunpack.c.l.b16 %v170
  %v203 = vunpack.c.l.b16 %v171
  %v204 = vunpack.c.l.b16 %v172
  %v205 = vunpack.c.l.b16 %v173
  %v206 = vunpack.c.l.b16 %v174
  %v207 = vunpack.c.l.b16 %v175
  %v208 = vunpack.c.l.b16 %v176
  %v209 = vunpack.c.l.b16 %v177
  %v210 = vunpack.c.l.b16 %v178
  %v211 = vunpack.c.l.b16 %v179
  %v212 = vunpack.c.l.b16 %v180
  %v213 = vunpack.c.l.b16 %v181
  %v214 = vunpack.c.l.b16 %v182
  %v215 = vunpack.c.l.b16 %v183
  %v216 = vpack.c.b16 %v201, %v200
  %v217 = vpack.c.b16 %v203, %v202
  %v218 = vpack.c.b16 %v205, %v204
  %v219 = vpack.c.b16 %v207, %v206
  %v220 = vpack.c.b16 %v209, %v208
  %v221 = vpack.c.b16 %v211, %v210
  %v222 = vpack.c.b16 %v213, %v212
  %v223 = vpack.c.b16 %v215, %v214
  %232 = vmatprep.subr.bf16.mxu0 0
  %233 = vmatpush1.bf16.msra.mxu0 %v223
  %234 = vmatprep.subr.bf16.mxu0 0
  %235 = vmatpush1.bf16.msra.mxu0 %v222
  %236 = vmatprep.subr.bf16.mxu0 0
  %237 = vmatpush1.bf16.msra.mxu0 %v221
  %238 = vmatprep.subr.bf16.mxu0 0
  %239 = vmatpush1.bf16.msra.mxu0 %v220
  %240 = vmatprep.subr.bf16.mxu0 0
  %241 = vmatpush1.bf16.msra.mxu0 %v219
  %242 = vmatprep.subr.bf16.mxu0 0
  %243 = vmatpush1.bf16.msra.mxu0 %v218
  %244 = vmatprep.subr.bf16.mxu0 0
  %245 = vmatpush1.bf16.msra.mxu0 %v217
  %246 = vmatprep.subr.bf16.mxu0 0
  %247 = vmatpush1.bf16.msra.mxu0 %v216
  %248 = vmatprep.subr.bf16.mxu0 0
  %249 = vmatpush2.bf16.msra.mxu0 0
  %250 = vmatprep.subr.bf16.mxu0 0
  %251 = vmatpush2.bf16.msra.mxu0 0
  %252 = vmatprep.subr.bf16.mxu0 0
  %253 = vmatpush2.bf16.msra.mxu0 0
  %254 = vmatprep.subr.bf16.mxu0 0
  %255 = vmatpush2.bf16.msra.mxu0 0
  %256 = vmatprep.subr.bf16.mxu0 0
  %257 = vmatpush2.bf16.msra.mxu0 0
  %258 = vmatprep.subr.bf16.mxu0 0
  %259 = vmatpush2.bf16.msra.mxu0 0
  %260 = vmatprep.subr.bf16.mxu0 0
  %261 = vmatpush2.bf16.msra.mxu0 0
  %262 = vmatprep.subr.bf16.mxu0 0
  %263 = vmatpush2.bf16.msra.mxu0 0
  %264 = vmatprep.mubr.bf16.mxu0 0
  %265 = vmatmul.mubr.bf16.gmra.mxu0 %v167
  %v266 = vpop.f32.mrf.mxu0
  %v267 = vadd.f32 0.0, %v266
  %v268 = vpop.f32.mrf.mxu0
  %v269 = vpop.f32.mrf.mxu0
  %v270 = vadd.f32 0.0, %v269
  %v271 = vpop.f32.mrf.mxu0
  %272 = vdwg.mxu0
  %v275 = vunpack.c.l.b16 %v149
  %v276 = vunpack.c.l.b16 %v150
  %v277 = vpack.c.b16 %v276, %v275
  %v295 = vunpack.c.l.b16 %v151
  %v296 = vunpack.c.l.b16 %v152
  %v297 = vunpack.c.l.b16 %v153
  %v298 = vunpack.c.l.b16 %v154
  %v299 = vunpack.c.l.b16 %v155
  %v300 = vunpack.c.l.b16 %v156
  %v301 = vunpack.c.l.b16 %v157
  %v302 = vunpack.c.l.b16 %v158
  %v303 = vunpack.c.l.b16 %v159
  %v304 = vunpack.c.l.b16 %v160
  %v305 = vunpack.c.l.b16 %v161
  %v306 = vunpack.c.l.b16 %v162
  %v307 = vunpack.c.l.b16 %v163
  %v308 = vunpack.c.l.b16 %v164
  %v309 = vunpack.c.l.b16 %v165
  %v310 = vunpack.c.l.b16 %v166
  %v311 = vpack.c.b16 %v296, %v295
  %v312 = vpack.c.b16 %v298, %v297
  %v313 = vpack.c.b16 %v300, %v299
  %v314 = vpack.c.b16 %v302, %v301
  %v315 = vpack.c.b16 %v304, %v303
  %v316 = vpack.c.b16 %v306, %v305
  %v317 = vpack.c.b16 %v308, %v307
  %v318 = vpack.c.b16 %v310, %v309
  %327 = vmatprep.subr.bf16.mxu0 0
  %328 = vmatpush1.bf16.msra.mxu0 %v318
  %329 = vmatprep.subr.bf16.mxu0 0
  %330 = vmatpush1.bf16.msra.mxu0 %v317
  %331 = vmatprep.subr.bf16.mxu0 0
  %332 = vmatpush1.bf16.msra.mxu0 %v316
  %333 = vmatprep.subr.bf16.mxu0 0
  %334 = vmatpush1.bf16.msra.mxu0 %v315
  %335 = vmatprep.subr.bf16.mxu0 0
  %336 = vmatpush1.bf16.msra.mxu0 %v314
  %337 = vmatprep.subr.bf16.mxu0 0
  %338 = vmatpush1.bf16.msra.mxu0 %v313
  %339 = vmatprep.subr.bf16.mxu0 0
  %340 = vmatpush1.bf16.msra.mxu0 %v312
  %341 = vmatprep.subr.bf16.mxu0 0
  %342 = vmatpush1.bf16.msra.mxu0 %v311
  %343 = vmatprep.subr.bf16.mxu0 0
  %344 = vmatpush2.bf16.msra.mxu0 0
  %345 = vmatprep.subr.bf16.mxu0 0
  %346 = vmatpush2.bf16.msra.mxu0 0
  %347 = vmatprep.subr.bf16.mxu0 0
  %348 = vmatpush2.bf16.msra.mxu0 0
  %349 = vmatprep.subr.bf16.mxu0 0
  %350 = vmatpush2.bf16.msra.mxu0 0
  %351 = vmatprep.subr.bf16.mxu0 0
  %352 = vmatpush2.bf16.msra.mxu0 0
  %353 = vmatprep.subr.bf16.mxu0 0
  %354 = vmatpush2.bf16.msra.mxu0 0
  %355 = vmatprep.subr.bf16.mxu0 0
  %356 = vmatpush2.bf16.msra.mxu0 0
  %357 = vmatprep.subr.bf16.mxu0 0
  %358 = vmatpush2.bf16.msra.mxu0 0
  %359 = vmatprep.mubr.bf16.mxu0 0
  %360 = vmatmul.mubr.bf16.gmra.mxu0 %v277
  %v361 = vpop.f32.mrf.mxu0
  %v362 = vadd.f32 %v267, %v361
  %v363 = vpop.f32.mrf.mxu0
  %v364 = vpop.f32.mrf.mxu0
  %v365 = vadd.f32 %v270, %v364
  %v366 = vpop.f32.mrf.mxu0
  %367 = vdwg.mxu0
  %v368 = vld [vmem:[%s6] sm:$0x1]
  %v370 = vlaneseq
  %v371 = vshrl.u32 %v370, 7
  %v372 = vsub.s32 0, %v371
  %v373 = vrot.slane %v368, %v372
  %v375 = vadd.f32 %v362, %v373
  %v376 = vadd.f32 %v365, %v373
  %v377 = vtanh.pop %v375
  %v378 = vtanh.pop %v376
  %v379 = vpack.c.bf16 %v378, %v377
  %v381 = vunpack.c.l.b16 %v379
  %v382 = vunpack.c.h.b16 %v379
  %v383 = vpack.c.b16 %v381, %v381
  %v384 = vpack.c.b16 %v382, %v382
  %387 = vst [vmem:[%s7] sm:$0xf] %v383
  %388 = vst [vmem:[%s7 + $0x4] sm:$0xf] %v384
  // Predicated region
  $region30: #{lghrec_forward.5} parent=0 // pred_check
    _
  $region31: #{lghrec_forward.5} parent=0 // pred_check_branch
    %390 = sbr.rel (0) target = $region33
  $region32: #{lghrec_forward.5} parent=0 // pred_region
    _
  $region33: #{lghrec_forward.5} parent=0 // pred_fallthru
    _
  // Predicated region
  $region34: #{lghrec_forward.5} parent=0 // pred_check
    _
  $region35: #{lghrec_forward.5} parent=0 // pred_check_branch
    %392 = sbr.rel (0) target = $region37
  $region36: #{lghrec_forward.5} parent=0 // pred_region
    _
  $region37: #{lghrec_forward.5} parent=0 // pred_fallthru
    _

// kernel: lghrec_forward.6
$region0: #{lghrec_forward.6}
  #allocation0 [shape = 'u32[]', space=smem, size = 0x4, offset = 0x4, fixed_abs, tag = 'smem constant byte address 0x4 - core index']
  #allocation1 [shape = 'u32[144,128]{1,0:T(1,128)}', space=vmem, size = 0x12000, scoped, tag = 'internal scratch']
  %s0 = inlined_call_operand.vmem [shape: bf16[128,128], index: 0, kind: input, shape index: {}]
  %s1 = inlined_call_operand.vmem [shape: bf16[128,128], index: 1, kind: input, shape index: {}]
  %s2 = inlined_call_operand.vmem [shape: f32[128,128], index: 2, kind: input, shape index: {}]
  %s3 = inlined_call_operand.vmem [shape: bf16[128,128], index: 3, kind: output, shape index: {0}]
  %s4 = inlined_call_operand.vmem [shape: f32[128,128], index: 4, kind: output, shape index: {1}]
  %5 = xla_tuple %s3, %s4
  %s6 = sld [smem:[#allocation0]]
  $region30: #{lghrec_forward.6} parent=0
    _
  %s8 = ssub.s32 1, %s6
  %s9 = scalar_select 0, %s8, %s6
  // Predicated region
  $region2: #{lghrec_forward.6} parent=0 // pred_check
    _
  $region3: #{lghrec_forward.6} parent=0 // pred_check_branch
    %11 = sbr.rel (0) target = $region5
  $region4: #{lghrec_forward.6} parent=0 // pred_region
    _
  $region5: #{lghrec_forward.6} parent=0 // pred_fallthru
    _
  // Predicated region
  $region6: #{lghrec_forward.6} parent=0 // pred_check
    _
  $region7: #{lghrec_forward.6} parent=0 // pred_check_branch
    %13 = sbr.rel (0) target = $region9
  $region8: #{lghrec_forward.6} parent=0 // pred_region
    _
  $region9: #{lghrec_forward.6} parent=0 // pred_fallthru
    _
  // Predicated region
  $region10: #{lghrec_forward.6} parent=0 // pred_check
    _
  $region11: #{lghrec_forward.6} parent=0 // pred_check_branch
    %15 = sbr.rel (0) target = $region13
  $region12: #{lghrec_forward.6} parent=0 // pred_region
    _
  $region13: #{lghrec_forward.6} parent=0 // pred_fallthru
    _
  %v17 = vld [vmem:[%s0] sm:$0xf]
  %v18 = vld [vmem:[%s0 + $0x4] sm:$0xf]
  %v19 = vld [vmem:[%s0 + $0x8] sm:$0xf]
  %v20 = vld [vmem:[%s0 + $0xc] sm:$0xf]
  %v21 = vld [vmem:[%s0 + $0x10] sm:$0xf]
  %v22 = vld [vmem:[%s0 + $0x14] sm:$0xf]
  %v23 = vld [vmem:[%s0 + $0x18] sm:$0xf]
  %v24 = vld [vmem:[%s0 + $0x1c] sm:$0xf]
  %v25 = vld [vmem:[%s0 + $0x20] sm:$0xf]
  %v26 = vld [vmem:[%s0 + $0x24] sm:$0xf]
  %v27 = vld [vmem:[%s0 + $0x28] sm:$0xf]
  %v28 = vld [vmem:[%s0 + $0x2c] sm:$0xf]
  %v29 = vld [vmem:[%s0 + $0x30] sm:$0xf]
  %v30 = vld [vmem:[%s0 + $0x34] sm:$0xf]
  %v31 = vld [vmem:[%s0 + $0x38] sm:$0xf]
  %v32 = vld [vmem:[%s0 + $0x3c] sm:$0xf]
  %v33 = vld [vmem:[%s1] sm:$0xf]
  %v34 = vld [vmem:[%s1 + $0x4] sm:$0xf]
  %v35 = vld [vmem:[%s1 + $0x8] sm:$0xf]
  %v36 = vld [vmem:[%s1 + $0xc] sm:$0xf]
  %v37 = vld [vmem:[%s1 + $0x10] sm:$0xf]
  %v38 = vld [vmem:[%s1 + $0x14] sm:$0xf]
  %v39 = vld [vmem:[%s1 + $0x18] sm:$0xf]
  %v40 = vld [vmem:[%s1 + $0x1c] sm:$0xf]
  %v41 = vld [vmem:[%s1 + $0x20] sm:$0xf]
  %v42 = vld [vmem:[%s1 + $0x24] sm:$0xf]
  %v43 = vld [vmem:[%s1 + $0x28] sm:$0xf]
  %v44 = vld [vmem:[%s1 + $0x2c] sm:$0xf]
  %v45 = vld [vmem:[%s1 + $0x30] sm:$0xf]
  %v46 = vld [vmem:[%s1 + $0x34] sm:$0xf]
  %v47 = vld [vmem:[%s1 + $0x38] sm:$0xf]
  %v48 = vld [vmem:[%s1 + $0x3c] sm:$0xf]
  %v65 = vunpack.c.l.b16 %v17
  %v66 = vunpack.c.l.b16 %v18
  %v67 = vunpack.c.l.b16 %v19
  %v68 = vunpack.c.l.b16 %v20
  %v69 = vunpack.c.l.b16 %v21
  %v70 = vunpack.c.l.b16 %v22
  %v71 = vunpack.c.l.b16 %v23
  %v72 = vunpack.c.l.b16 %v24
  %v73 = vunpack.c.l.b16 %v25
  %v74 = vunpack.c.l.b16 %v26
  %v75 = vunpack.c.l.b16 %v27
  %v76 = vunpack.c.l.b16 %v28
  %v77 = vunpack.c.l.b16 %v29
  %v78 = vunpack.c.l.b16 %v30
  %v79 = vunpack.c.l.b16 %v31
  %v80 = vunpack.c.l.b16 %v32
  %v81 = vpack.c.b16 %v66, %v65
  %v82 = vpack.c.b16 %v68, %v67
  %v83 = vpack.c.b16 %v70, %v69
  %v84 = vpack.c.b16 %v72, %v71
  %v85 = vpack.c.b16 %v74, %v73
  %v86 = vpack.c.b16 %v76, %v75
  %v87 = vpack.c.b16 %v78, %v77
  %v88 = vpack.c.b16 %v80, %v79
  %v113 = vunpack.c.l.b16 %v33
  %v114 = vunpack.c.l.b16 %v34
  %v115 = vunpack.c.l.b16 %v35
  %v116 = vunpack.c.l.b16 %v36
  %v117 = vunpack.c.l.b16 %v37
  %v118 = vunpack.c.l.b16 %v38
  %v119 = vunpack.c.l.b16 %v39
  %v120 = vunpack.c.l.b16 %v40
  %v121 = vunpack.c.l.b16 %v41
  %v122 = vunpack.c.l.b16 %v42
  %v123 = vunpack.c.l.b16 %v43
  %v124 = vunpack.c.l.b16 %v44
  %v125 = vunpack.c.l.b16 %v45
  %v126 = vunpack.c.l.b16 %v46
  %v127 = vunpack.c.l.b16 %v47
  %v128 = vunpack.c.l.b16 %v48
  %v129 = vpack.c.b16 %v114, %v113
  %v130 = vpack.c.b16 %v116, %v115
  %v131 = vpack.c.b16 %v118, %v117
  %v132 = vpack.c.b16 %v120, %v119
  %v133 = vpack.c.b16 %v122, %v121
  %v134 = vpack.c.b16 %v124, %v123
  %v135 = vpack.c.b16 %v126, %v125
  %v136 = vpack.c.b16 %v128, %v127
  %145 = vmatprep.subr.bf16.mxu0 0
  %146 = vmatpush1.bf16.msra.mxu0 %v136
  %147 = vmatprep.subr.bf16.mxu0 0
  %148 = vmatpush1.bf16.msra.mxu0 %v135
  %149 = vmatprep.subr.bf16.mxu0 0
  %150 = vmatpush1.bf16.msra.mxu0 %v134
  %151 = vmatprep.subr.bf16.mxu0 0
  %152 = vmatpush1.bf16.msra.mxu0 %v133
  %153 = vmatprep.subr.bf16.mxu0 0
  %154 = vmatpush1.bf16.msra.mxu0 %v132
  %155 = vmatprep.subr.bf16.mxu0 0
  %156 = vmatpush1.bf16.msra.mxu0 %v131
  %157 = vmatprep.subr.bf16.mxu0 0
  %158 = vmatpush1.bf16.msra.mxu0 %v130
  %159 = vmatprep.subr.bf16.mxu0 0
  %160 = vmatpush1.bf16.msra.mxu0 %v129
  %161 = vmatprep.subr.bf16.mxu0 0
  %162 = vmatpush2.bf16.msra.mxu0 0
  %163 = vmatprep.subr.bf16.mxu0 0
  %164 = vmatpush2.bf16.msra.mxu0 0
  %165 = vmatprep.subr.bf16.mxu0 0
  %166 = vmatpush2.bf16.msra.mxu0 0
  %167 = vmatprep.subr.bf16.mxu0 0
  %168 = vmatpush2.bf16.msra.mxu0 0
  %169 = vmatprep.subr.bf16.mxu0 0
  %170 = vmatpush2.bf16.msra.mxu0 0
  %171 = vmatprep.subr.bf16.mxu0 0
  %172 = vmatpush2.bf16.msra.mxu0 0
  %173 = vmatprep.subr.bf16.mxu0 0
  %174 = vmatpush2.bf16.msra.mxu0 0
  %175 = vmatprep.subr.bf16.mxu0 0
  %176 = vmatpush2.bf16.msra.mxu0 0
  %177 = vmatprep.mubr.bf16.mxu0 0
  %178 = vmatmul.mubr.bf16.gmra.mxu0 %v81
  %v179 = vpop.f32.mrf.mxu0
  %v180 = vadd.f32 0.0, %v179
  %v181 = vpop.f32.mrf.mxu0
  %v182 = vpop.f32.mrf.mxu0
  %v183 = vadd.f32 0.0, %v182
  %v184 = vpop.f32.mrf.mxu0
  %185 = vmatprep.mubr.bf16.mxu0 0
  %186 = vmatmul.mubr.bf16.gmra.mxu0 %v82
  %v187 = vpop.f32.mrf.mxu0
  %v188 = vadd.f32 0.0, %v187
  %v189 = vpop.f32.mrf.mxu0
  %v190 = vpop.f32.mrf.mxu0
  %v191 = vadd.f32 0.0, %v190
  %v192 = vpop.f32.mrf.mxu0
  %193 = vmatprep.mubr.bf16.mxu0 0
  %194 = vmatmul.mubr.bf16.gmra.mxu0 %v83
  %v195 = vpop.f32.mrf.mxu0
  %v196 = vadd.f32 0.0, %v195
  %v197 = vpop.f32.mrf.mxu0
  %v198 = vpop.f32.mrf.mxu0
  %v199 = vadd.f32 0.0, %v198
  %v200 = vpop.f32.mrf.mxu0
  %201 = vmatprep.mubr.bf16.mxu0 0
  %202 = vmatmul.mubr.bf16.gmra.mxu0 %v84
  %v203 = vpop.f32.mrf.mxu0
  %v204 = vadd.f32 0.0, %v203
  %v205 = vpop.f32.mrf.mxu0
  %v206 = vpop.f32.mrf.mxu0
  %v207 = vadd.f32 0.0, %v206
  %v208 = vpop.f32.mrf.mxu0
  %209 = vmatprep.mubr.bf16.mxu0 0
  %210 = vmatmul.mubr.bf16.gmra.mxu0 %v85
  %v211 = vpop.f32.mrf.mxu0
  %v212 = vadd.f32 0.0, %v211
  %v213 = vpop.f32.mrf.mxu0
  %v214 = vpop.f32.mrf.mxu0
  %v215 = vadd.f32 0.0, %v214
  %v216 = vpop.f32.mrf.mxu0
  %217 = vmatprep.mubr.bf16.mxu0 0
  %218 = vmatmul.mubr.bf16.gmra.mxu0 %v86
  %v219 = vpop.f32.mrf.mxu0
  %v220 = vadd.f32 0.0, %v219
  %v221 = vpop.f32.mrf.mxu0
  %v222 = vpop.f32.mrf.mxu0
  %v223 = vadd.f32 0.0, %v222
  %v224 = vpop.f32.mrf.mxu0
  %225 = vmatprep.mubr.bf16.mxu0 0
  %226 = vmatmul.mubr.bf16.gmra.mxu0 %v87
  %v227 = vpop.f32.mrf.mxu0
  %v228 = vadd.f32 0.0, %v227
  %v229 = vpop.f32.mrf.mxu0
  %v230 = vpop.f32.mrf.mxu0
  %v231 = vadd.f32 0.0, %v230
  %v232 = vpop.f32.mrf.mxu0
  %233 = vmatprep.mubr.bf16.mxu0 0
  %234 = vmatmul.mubr.bf16.gmra.mxu0 %v88
  %v235 = vpop.f32.mrf.mxu0
  %v236 = vadd.f32 0.0, %v235
  %v237 = vpop.f32.mrf.mxu0
  %v238 = vpop.f32.mrf.mxu0
  %v239 = vadd.f32 0.0, %v238
  %v240 = vpop.f32.mrf.mxu0
  %241 = vdwg.mxu0
  %v242 = vpack.c.bf16 %v183, %v180
  %v243 = vpack.c.bf16 %v191, %v188
  %v244 = vpack.c.bf16 %v199, %v196
  %v245 = vpack.c.bf16 %v207, %v204
  %v246 = vpack.c.bf16 %v215, %v212
  %v247 = vpack.c.bf16 %v223, %v220
  %v248 = vpack.c.bf16 %v231, %v228
  %v249 = vpack.c.bf16 %v239, %v236
  %v258 = vunpack.c.l.b16 %v242
  %v259 = vunpack.c.h.b16 %v242
  %v260 = vunpack.c.l.b16 %v243
  %v261 = vunpack.c.h.b16 %v243
  %v262 = vunpack.c.l.b16 %v244
  %v263 = vunpack.c.h.b16 %v244
  %v264 = vunpack.c.l.b16 %v245
  %v265 = vunpack.c.h.b16 %v245
  %v266 = vunpack.c.l.b16 %v246
  %v267 = vunpack.c.h.b16 %v246
  %v268 = vunpack.c.l.b16 %v247
  %v269 = vunpack.c.h.b16 %v247
  %v270 = vunpack.c.l.b16 %v248
  %v271 = vunpack.c.h.b16 %v248
  %v272 = vunpack.c.l.b16 %v249
  %v273 = vunpack.c.h.b16 %v249
  %v274 = vpack.c.b16 %v258, %v258
  %v275 = vpack.c.b16 %v259, %v259
  %v276 = vpack.c.b16 %v260, %v260
  %v277 = vpack.c.b16 %v261, %v261
  %v278 = vpack.c.b16 %v262, %v262
  %v279 = vpack.c.b16 %v263, %v263
  %v280 = vpack.c.b16 %v264, %v264
  %v281 = vpack.c.b16 %v265, %v265
  %v282 = vpack.c.b16 %v266, %v266
  %v283 = vpack.c.b16 %v267, %v267
  %v284 = vpack.c.b16 %v268, %v268
  %v285 = vpack.c.b16 %v269, %v269
  %v286 = vpack.c.b16 %v270, %v270
  %v287 = vpack.c.b16 %v271, %v271
  %v288 = vpack.c.b16 %v272, %v272
  %v289 = vpack.c.b16 %v273, %v273
  %306 = vst [vmem:[%s3] sm:$0xf] %v274
  %307 = vst [vmem:[%s3 + $0x4] sm:$0xf] %v275
  %308 = vst [vmem:[%s3 + $0x8] sm:$0xf] %v276
  %309 = vst [vmem:[%s3 + $0xc] sm:$0xf] %v277
  %310 = vst [vmem:[%s3 + $0x10] sm:$0xf] %v278
  %311 = vst [vmem:[%s3 + $0x14] sm:$0xf] %v279
  %312 = vst [vmem:[%s3 + $0x18] sm:$0xf] %v280
  %313 = vst [vmem:[%s3 + $0x1c] sm:$0xf] %v281
  %314 = vst [vmem:[%s3 + $0x20] sm:$0xf] %v282
  %315 = vst [vmem:[%s3 + $0x24] sm:$0xf] %v283
  %316 = vst [vmem:[%s3 + $0x28] sm:$0xf] %v284
  %317 = vst [vmem:[%s3 + $0x2c] sm:$0xf] %v285
  %318 = vst [vmem:[%s3 + $0x30] sm:$0xf] %v286
  %319 = vst [vmem:[%s3 + $0x34] sm:$0xf] %v287
  %320 = vst [vmem:[%s3 + $0x38] sm:$0xf] %v288
  %321 = vst [vmem:[%s3 + $0x3c] sm:$0xf] %v289
  %v322 = vld [vmem:[%s2] sm:$0xff]
  %v323 = vld [vmem:[%s2 + $0x8] sm:$0xff]
  %v324 = vld [vmem:[%s2 + $0x10] sm:$0xff]
  %v325 = vld [vmem:[%s2 + $0x18] sm:$0xff]
  %v326 = vld [vmem:[%s2 + $0x20] sm:$0xff]
  %v327 = vld [vmem:[%s2 + $0x28] sm:$0xff]
  %v328 = vld [vmem:[%s2 + $0x30] sm:$0xff]
  %v329 = vld [vmem:[%s2 + $0x38] sm:$0xff]
  %v330 = vld [vmem:[%s2 + $0x40] sm:$0xff]
  %v331 = vld [vmem:[%s2 + $0x48] sm:$0xff]
  %v332 = vld [vmem:[%s2 + $0x50] sm:$0xff]
  %v333 = vld [vmem:[%s2 + $0x58] sm:$0xff]
  %v334 = vld [vmem:[%s2 + $0x60] sm:$0xff]
  %v335 = vld [vmem:[%s2 + $0x68] sm:$0xff]
  %v336 = vld [vmem:[%s2 + $0x70] sm:$0xff]
  %v337 = vld [vmem:[%s2 + $0x78] sm:$0xff]
  %v338 = vadd.f32 %v322, %v180
  %v339 = vadd.f32 %v323, %v183
  %v340 = vadd.f32 %v324, %v188
  %v341 = vadd.f32 %v325, %v191
  %v342 = vadd.f32 %v326, %v196
  %v343 = vadd.f32 %v327, %v199
  %v344 = vadd.f32 %v328, %v204
  %v345 = vadd.f32 %v329, %v207
  %v346 = vadd.f32 %v330, %v212
  %v347 = vadd.f32 %v331, %v215
  %v348 = vadd.f32 %v332, %v220
  %v349 = vadd.f32 %v333, %v223
  %v350 = vadd.f32 %v334, %v228
  %v351 = vadd.f32 %v335, %v231
  %v352 = vadd.f32 %v336, %v236
  %v353 = vadd.f32 %v337, %v239
  %354 = vst [vmem:[%s4] sm:$0xff] %v338
  %355 = vst [vmem:[%s4 + $0x8] sm:$0xff] %v339
  %356 = vst [vmem:[%s4 + $0x10] sm:$0xff] %v340
  %357 = vst [vmem:[%s4 + $0x18] sm:$0xff] %v341
  %358 = vst [vmem:[%s4 + $0x20] sm:$0xff] %v342
  %359 = vst [vmem:[%s4 + $0x28] sm:$0xff] %v343
  %360 = vst [vmem:[%s4 + $0x30] sm:$0xff] %v344
  %361 = vst [vmem:[%s4 + $0x38] sm:$0xff] %v345
  %362 = vst [vmem:[%s4 + $0x40] sm:$0xff] %v346
  %363 = vst [vmem:[%s4 + $0x48] sm:$0xff] %v347
  %364 = vst [vmem:[%s4 + $0x50] sm:$0xff] %v348
  %365 = vst [vmem:[%s4 + $0x58] sm:$0xff] %v349
  %366 = vst [vmem:[%s4 + $0x60] sm:$0xff] %v350
  %367 = vst [vmem:[%s4 + $0x68] sm:$0xff] %v351
  %368 = vst [vmem:[%s4 + $0x70] sm:$0xff] %v352
  %369 = vst [vmem:[%s4 + $0x78] sm:$0xff] %v353
  // Predicated region
  $region14: #{lghrec_forward.6} parent=0 // pred_check
    _
  $region15: #{lghrec_forward.6} parent=0 // pred_check_branch
    %371 = sbr.rel (0) target = $region17
  $region16: #{lghrec_forward.6} parent=0 // pred_region
    _
  $region17: #{lghrec_forward.6} parent=0 // pred_fallthru
    _
  // Predicated region
  $region18: #{lghrec_forward.6} parent=0 // pred_check
    _
  $region19: #{lghrec_forward.6} parent=0 // pred_check_branch
    %373 = sbr.rel (0) target = $region21
  $region20: #{lghrec_forward.6} parent=0 // pred_region
    _
  $region21: #{lghrec_forward.6} parent=0 // pred_fallthru
    _
  // Predicated region
  $region22: #{lghrec_forward.6} parent=0 // pred_check
    _
  $region23: #{lghrec_forward.6} parent=0 // pred_check_branch
    %375 = sbr.rel (0) target = $region25
  $region24: #{lghrec_forward.6} parent=0 // pred_region
    _
  $region25: #{lghrec_forward.6} parent=0 // pred_fallthru
    _
  // Predicated region
  $region26: #{lghrec_forward.6} parent=0 // pred_check
    _
  $region27: #{lghrec_forward.6} parent=0 // pred_check_branch
    %377 = sbr.rel (0) target = $region29
  $region28: #{lghrec_forward.6} parent=0 // pred_region
    _
  $region29: #{lghrec_forward.6} parent=0 // pred_fallthru
    _

// kernel: lghrec_forward.7
$region0: #{lghrec_forward.7}
  #allocation0 [shape = 'u32[]', space=smem, size = 0x4, offset = 0x4, fixed_abs, tag = 'smem constant byte address 0x4 - core index']
  #allocation1 [shape = 'u32[144,128]{1,0:T(1,128)}', space=vmem, size = 0x12000, scoped, tag = 'internal scratch']
  %s0 = inlined_call_operand.vmem [shape: bf16[128,128], index: 0, kind: input, shape index: {}]
  %s1 = inlined_call_operand.vmem [shape: bf16[128,128], index: 1, kind: input, shape index: {}]
  %s2 = inlined_call_operand.vmem [shape: f32[128,128], index: 2, kind: input, shape index: {}]
  %s3 = inlined_call_operand.hbm [shape: bf16[128,128], index: 3, kind: output, shape index: {0}]
  %s4 = inlined_call_operand.vmem [shape: f32[128,128], index: 4, kind: output, shape index: {1}]
  %5 = xla_tuple %s3, %s4
  %s6 = sld [smem:[#allocation0]]
  $region30: #{lghrec_forward.7} parent=0
    _
  %s8 = ssub.s32 1, %s6
  %s9 = scalar_select 0, %s8, %s6
  $region1: #{lghrec_forward.7} parent=0
    #allocation2 [shape = 'u8[32768]{0}', space=vmem, size = 0x8000, scoped, tag = 'output window, operand 0, single buffered']
    #allocation3 [shape = 's32[1]{0}', space=sflag, size = 0x4, scoped, tag = 'scoped memory for lghrec_forward.7']
    %10 = vsyncpa [#allocation3], 0
    // Predicated region
    $region2: #{lghrec_forward.7} parent=1 // pred_check
      _
    $region3: #{lghrec_forward.7} parent=1 // pred_check_branch
      %12 = sbr.rel (0) target = $region5
    $region4: #{lghrec_forward.7} parent=1 // pred_region
      _
    $region5: #{lghrec_forward.7} parent=1 // pred_fallthru
      _
    // Predicated region
    $region6: #{lghrec_forward.7} parent=1 // pred_check
      _
    $region7: #{lghrec_forward.7} parent=1 // pred_check_branch
      %14 = sbr.rel (0) target = $region9
    $region8: #{lghrec_forward.7} parent=1 // pred_region
      _
    $region9: #{lghrec_forward.7} parent=1 // pred_fallthru
      _
    // Predicated region
    $region10: #{lghrec_forward.7} parent=1 // pred_check
      _
    $region11: #{lghrec_forward.7} parent=1 // pred_check_branch
      %16 = sbr.rel (0) target = $region13
    $region12: #{lghrec_forward.7} parent=1 // pred_region
      _
    $region13: #{lghrec_forward.7} parent=1 // pred_fallthru
      _
    %v18 = vld [vmem:[%s0] sm:$0xf]
    %v19 = vld [vmem:[%s0 + $0x4] sm:$0xf]
    %v20 = vld [vmem:[%s0 + $0x8] sm:$0xf]
    %v21 = vld [vmem:[%s0 + $0xc] sm:$0xf]
    %v22 = vld [vmem:[%s0 + $0x10] sm:$0xf]
    %v23 = vld [vmem:[%s0 + $0x14] sm:$0xf]
    %v24 = vld [vmem:[%s0 + $0x18] sm:$0xf]
    %v25 = vld [vmem:[%s0 + $0x1c] sm:$0xf]
    %v26 = vld [vmem:[%s0 + $0x20] sm:$0xf]
    %v27 = vld [vmem:[%s0 + $0x24] sm:$0xf]
    %v28 = vld [vmem:[%s0 + $0x28] sm:$0xf]
    %v29 = vld [vmem:[%s0 + $0x2c] sm:$0xf]
    %v30 = vld [vmem:[%s0 + $0x30] sm:$0xf]
    %v31 = vld [vmem:[%s0 + $0x34] sm:$0xf]
    %v32 = vld [vmem:[%s0 + $0x38] sm:$0xf]
    %v33 = vld [vmem:[%s0 + $0x3c] sm:$0xf]
    %v34 = vld [vmem:[%s1] sm:$0xf]
    %v35 = vld [vmem:[%s1 + $0x4] sm:$0xf]
    %v36 = vld [vmem:[%s1 + $0x8] sm:$0xf]
    %v37 = vld [vmem:[%s1 + $0xc] sm:$0xf]
    %v38 = vld [vmem:[%s1 + $0x10] sm:$0xf]
    %v39 = vld [vmem:[%s1 + $0x14] sm:$0xf]
    %v40 = vld [vmem:[%s1 + $0x18] sm:$0xf]
    %v41 = vld [vmem:[%s1 + $0x1c] sm:$0xf]
    %v42 = vld [vmem:[%s1 + $0x20] sm:$0xf]
    %v43 = vld [vmem:[%s1 + $0x24] sm:$0xf]
    %v44 = vld [vmem:[%s1 + $0x28] sm:$0xf]
    %v45 = vld [vmem:[%s1 + $0x2c] sm:$0xf]
    %v46 = vld [vmem:[%s1 + $0x30] sm:$0xf]
    %v47 = vld [vmem:[%s1 + $0x34] sm:$0xf]
    %v48 = vld [vmem:[%s1 + $0x38] sm:$0xf]
    %v49 = vld [vmem:[%s1 + $0x3c] sm:$0xf]
    %v66 = vunpack.c.l.b16 %v18
    %v67 = vunpack.c.l.b16 %v19
    %v68 = vunpack.c.l.b16 %v20
    %v69 = vunpack.c.l.b16 %v21
    %v70 = vunpack.c.l.b16 %v22
    %v71 = vunpack.c.l.b16 %v23
    %v72 = vunpack.c.l.b16 %v24
    %v73 = vunpack.c.l.b16 %v25
    %v74 = vunpack.c.l.b16 %v26
    %v75 = vunpack.c.l.b16 %v27
    %v76 = vunpack.c.l.b16 %v28
    %v77 = vunpack.c.l.b16 %v29
    %v78 = vunpack.c.l.b16 %v30
    %v79 = vunpack.c.l.b16 %v31
    %v80 = vunpack.c.l.b16 %v32
    %v81 = vunpack.c.l.b16 %v33
    %v82 = vpack.c.b16 %v67, %v66
    %v83 = vpack.c.b16 %v69, %v68
    %v84 = vpack.c.b16 %v71, %v70
    %v85 = vpack.c.b16 %v73, %v72
    %v86 = vpack.c.b16 %v75, %v74
    %v87 = vpack.c.b16 %v77, %v76
    %v88 = vpack.c.b16 %v79, %v78
    %v89 = vpack.c.b16 %v81, %v80
    %v114 = vunpack.c.l.b16 %v34
    %v115 = vunpack.c.l.b16 %v35
    %v116 = vunpack.c.l.b16 %v36
    %v117 = vunpack.c.l.b16 %v37
    %v118 = vunpack.c.l.b16 %v38
    %v119 = vunpack.c.l.b16 %v39
    %v120 = vunpack.c.l.b16 %v40
    %v121 = vunpack.c.l.b16 %v41
    %v122 = vunpack.c.l.b16 %v42
    %v123 = vunpack.c.l.b16 %v43
    %v124 = vunpack.c.l.b16 %v44
    %v125 = vunpack.c.l.b16 %v45
    %v126 = vunpack.c.l.b16 %v46
    %v127 = vunpack.c.l.b16 %v47
    %v128 = vunpack.c.l.b16 %v48
    %v129 = vunpack.c.l.b16 %v49
    %v130 = vpack.c.b16 %v115, %v114
    %v131 = vpack.c.b16 %v117, %v116
    %v132 = vpack.c.b16 %v119, %v118
    %v133 = vpack.c.b16 %v121, %v120
    %v134 = vpack.c.b16 %v123, %v122
    %v135 = vpack.c.b16 %v125, %v124
    %v136 = vpack.c.b16 %v127, %v126
    %v137 = vpack.c.b16 %v129, %v128
    %146 = vmatprep.subr.bf16.mxu0 0
    %147 = vmatpush1.bf16.msra.mxu0 %v137
    %148 = vmatprep.subr.bf16.mxu0 0
    %149 = vmatpush1.bf16.msra.mxu0 %v136
    %150 = vmatprep.subr.bf16.mxu0 0
    %151 = vmatpush1.bf16.msra.mxu0 %v135
    %152 = vmatprep.subr.bf16.mxu0 0
    %153 = vmatpush1.bf16.msra.mxu0 %v134
    %154 = vmatprep.subr.bf16.mxu0 0
    %155 = vmatpush1.bf16.msra.mxu0 %v133
    %156 = vmatprep.subr.bf16.mxu0 0
    %157 = vmatpush1.bf16.msra.mxu0 %v132
    %158 = vmatprep.subr.bf16.mxu0 0
    %159 = vmatpush1.bf16.msra.mxu0 %v131
    %160 = vmatprep.subr.bf16.mxu0 0
    %161 = vmatpush1.bf16.msra.mxu0 %v130
    %162 = vmatprep.subr.bf16.mxu0 0
    %163 = vmatpush2.bf16.msra.mxu0 0
    %164 = vmatprep.subr.bf16.mxu0 0
    %165 = vmatpush2.bf16.msra.mxu0 0
    %166 = vmatprep.subr.bf16.mxu0 0
    %167 = vmatpush2.bf16.msra.mxu0 0
    %168 = vmatprep.subr.bf16.mxu0 0
    %169 = vmatpush2.bf16.msra.mxu0 0
    %170 = vmatprep.subr.bf16.mxu0 0
    %171 = vmatpush2.bf16.msra.mxu0 0
    %172 = vmatprep.subr.bf16.mxu0 0
    %173 = vmatpush2.bf16.msra.mxu0 0
    %174 = vmatprep.subr.bf16.mxu0 0
    %175 = vmatpush2.bf16.msra.mxu0 0
    %176 = vmatprep.subr.bf16.mxu0 0
    %177 = vmatpush2.bf16.msra.mxu0 0
    %178 = vmatprep.mubr.bf16.mxu0 0
    %179 = vmatmul.mubr.bf16.gmra.mxu0 %v82
    %v180 = vpop.f32.mrf.mxu0
    %v181 = vadd.f32 0.0, %v180
    %v182 = vpop.f32.mrf.mxu0
    %v183 = vpop.f32.mrf.mxu0
    %v184 = vadd.f32 0.0, %v183
    %v185 = vpop.f32.mrf.mxu0
    %186 = vmatprep.mubr.bf16.mxu0 0
    %187 = vmatmul.mubr.bf16.gmra.mxu0 %v83
    %v188 = vpop.f32.mrf.mxu0
    %v189 = vadd.f32 0.0, %v188
    %v190 = vpop.f32.mrf.mxu0
    %v191 = vpop.f32.mrf.mxu0
    %v192 = vadd.f32 0.0, %v191
    %v193 = vpop.f32.mrf.mxu0
    %194 = vmatprep.mubr.bf16.mxu0 0
    %195 = vmatmul.mubr.bf16.gmra.mxu0 %v84
    %v196 = vpop.f32.mrf.mxu0
    %v197 = vadd.f32 0.0, %v196
    %v198 = vpop.f32.mrf.mxu0
    %v199 = vpop.f32.mrf.mxu0
    %v200 = vadd.f32 0.0, %v199
    %v201 = vpop.f32.mrf.mxu0
    %202 = vmatprep.mubr.bf16.mxu0 0
    %203 = vmatmul.mubr.bf16.gmra.mxu0 %v85
    %v204 = vpop.f32.mrf.mxu0
    %v205 = vadd.f32 0.0, %v204
    %v206 = vpop.f32.mrf.mxu0
    %v207 = vpop.f32.mrf.mxu0
    %v208 = vadd.f32 0.0, %v207
    %v209 = vpop.f32.mrf.mxu0
    %210 = vmatprep.mubr.bf16.mxu0 0
    %211 = vmatmul.mubr.bf16.gmra.mxu0 %v86
    %v212 = vpop.f32.mrf.mxu0
    %v213 = vadd.f32 0.0, %v212
    %v214 = vpop.f32.mrf.mxu0
    %v215 = vpop.f32.mrf.mxu0
    %v216 = vadd.f32 0.0, %v215
    %v217 = vpop.f32.mrf.mxu0
    %218 = vmatprep.mubr.bf16.mxu0 0
    %219 = vmatmul.mubr.bf16.gmra.mxu0 %v87
    %v220 = vpop.f32.mrf.mxu0
    %v221 = vadd.f32 0.0, %v220
    %v222 = vpop.f32.mrf.mxu0
    %v223 = vpop.f32.mrf.mxu0
    %v224 = vadd.f32 0.0, %v223
    %v225 = vpop.f32.mrf.mxu0
    %226 = vmatprep.mubr.bf16.mxu0 0
    %227 = vmatmul.mubr.bf16.gmra.mxu0 %v88
    %v228 = vpop.f32.mrf.mxu0
    %v229 = vadd.f32 0.0, %v228
    %v230 = vpop.f32.mrf.mxu0
    %v231 = vpop.f32.mrf.mxu0
    %v232 = vadd.f32 0.0, %v231
    %v233 = vpop.f32.mrf.mxu0
    %234 = vmatprep.mubr.bf16.mxu0 0
    %235 = vmatmul.mubr.bf16.gmra.mxu0 %v89
    %v236 = vpop.f32.mrf.mxu0
    %v237 = vadd.f32 0.0, %v236
    %v238 = vpop.f32.mrf.mxu0
    %v239 = vpop.f32.mrf.mxu0
    %v240 = vadd.f32 0.0, %v239
    %v241 = vpop.f32.mrf.mxu0
    %242 = vdwg.mxu0
    %v243 = vpack.c.bf16 %v184, %v181
    %v244 = vpack.c.bf16 %v192, %v189
    %v245 = vpack.c.bf16 %v200, %v197
    %v246 = vpack.c.bf16 %v208, %v205
    %v247 = vpack.c.bf16 %v216, %v213
    %v248 = vpack.c.bf16 %v224, %v221
    %v249 = vpack.c.bf16 %v232, %v229
    %v250 = vpack.c.bf16 %v240, %v237
    %v259 = vunpack.c.l.b16 %v243
    %v260 = vunpack.c.h.b16 %v243
    %v261 = vunpack.c.l.b16 %v244
    %v262 = vunpack.c.h.b16 %v244
    %v263 = vunpack.c.l.b16 %v245
    %v264 = vunpack.c.h.b16 %v245
    %v265 = vunpack.c.l.b16 %v246
    %v266 = vunpack.c.h.b16 %v246
    %v267 = vunpack.c.l.b16 %v247
    %v268 = vunpack.c.h.b16 %v247
    %v269 = vunpack.c.l.b16 %v248
    %v270 = vunpack.c.h.b16 %v248
    %v271 = vunpack.c.l.b16 %v249
    %v272 = vunpack.c.h.b16 %v249
    %v273 = vunpack.c.l.b16 %v250
    %v274 = vunpack.c.h.b16 %v250
    %v275 = vpack.c.b16 %v259, %v259
    %v276 = vpack.c.b16 %v260, %v260
    %v277 = vpack.c.b16 %v261, %v261
    %v278 = vpack.c.b16 %v262, %v262
    %v279 = vpack.c.b16 %v263, %v263
    %v280 = vpack.c.b16 %v264, %v264
    %v281 = vpack.c.b16 %v265, %v265
    %v282 = vpack.c.b16 %v266, %v266
    %v283 = vpack.c.b16 %v267, %v267
    %v284 = vpack.c.b16 %v268, %v268
    %v285 = vpack.c.b16 %v269, %v269
    %v286 = vpack.c.b16 %v270, %v270
    %v287 = vpack.c.b16 %v271, %v271
    %v288 = vpack.c.b16 %v272, %v272
    %v289 = vpack.c.b16 %v273, %v273
    %v290 = vpack.c.b16 %v274, %v274
    %307 = vst [vmem:[#allocation2] sm:$0xf] %v275
    %308 = vst [vmem:[#allocation2 + $0x4] sm:$0xf] %v276
    %309 = vst [vmem:[#allocation2 + $0x8] sm:$0xf] %v277
    %310 = vst [vmem:[#allocation2 + $0xc] sm:$0xf] %v278
    %311 = vst [vmem:[#allocation2 + $0x10] sm:$0xf] %v279
    %312 = vst [vmem:[#allocation2 + $0x14] sm:$0xf] %v280
    %313 = vst [vmem:[#allocation2 + $0x18] sm:$0xf] %v281
    %314 = vst [vmem:[#allocation2 + $0x1c] sm:$0xf] %v282
    %315 = vst [vmem:[#allocation2 + $0x20] sm:$0xf] %v283
    %316 = vst [vmem:[#allocation2 + $0x24] sm:$0xf] %v284
    %317 = vst [vmem:[#allocation2 + $0x28] sm:$0xf] %v285
    %318 = vst [vmem:[#allocation2 + $0x2c] sm:$0xf] %v286
    %319 = vst [vmem:[#allocation2 + $0x30] sm:$0xf] %v287
    %320 = vst [vmem:[#allocation2 + $0x34] sm:$0xf] %v288
    %321 = vst [vmem:[#allocation2 + $0x38] sm:$0xf] %v289
    %322 = vst [vmem:[#allocation2 + $0x3c] sm:$0xf] %v290
    %v323 = vld [vmem:[%s2] sm:$0xff]
    %v324 = vld [vmem:[%s2 + $0x8] sm:$0xff]
    %v325 = vld [vmem:[%s2 + $0x10] sm:$0xff]
    %v326 = vld [vmem:[%s2 + $0x18] sm:$0xff]
    %v327 = vld [vmem:[%s2 + $0x20] sm:$0xff]
    %v328 = vld [vmem:[%s2 + $0x28] sm:$0xff]
    %v329 = vld [vmem:[%s2 + $0x30] sm:$0xff]
    %v330 = vld [vmem:[%s2 + $0x38] sm:$0xff]
    %v331 = vld [vmem:[%s2 + $0x40] sm:$0xff]
    %v332 = vld [vmem:[%s2 + $0x48] sm:$0xff]
    %v333 = vld [vmem:[%s2 + $0x50] sm:$0xff]
    %v334 = vld [vmem:[%s2 + $0x58] sm:$0xff]
    %v335 = vld [vmem:[%s2 + $0x60] sm:$0xff]
    %v336 = vld [vmem:[%s2 + $0x68] sm:$0xff]
    %v337 = vld [vmem:[%s2 + $0x70] sm:$0xff]
    %v338 = vld [vmem:[%s2 + $0x78] sm:$0xff]
    %v339 = vadd.f32 %v323, %v181
    %v340 = vadd.f32 %v324, %v184
    %v341 = vadd.f32 %v325, %v189
    %v342 = vadd.f32 %v326, %v192
    %v343 = vadd.f32 %v327, %v197
    %v344 = vadd.f32 %v328, %v200
    %v345 = vadd.f32 %v329, %v205
    %v346 = vadd.f32 %v330, %v208
    %v347 = vadd.f32 %v331, %v213
    %v348 = vadd.f32 %v332, %v216
    %v349 = vadd.f32 %v333, %v221
    %v350 = vadd.f32 %v334, %v224
    %v351 = vadd.f32 %v335, %v229
    %v352 = vadd.f32 %v336, %v232
    %v353 = vadd.f32 %v337, %v237
    %v354 = vadd.f32 %v338, %v240
    %355 = vst [vmem:[%s4] sm:$0xff] %v339
    %356 = vst [vmem:[%s4 + $0x8] sm:$0xff] %v340
    %357 = vst [vmem:[%s4 + $0x10] sm:$0xff] %v341
    %358 = vst [vmem:[%s4 + $0x18] sm:$0xff] %v342
    %359 = vst [vmem:[%s4 + $0x20] sm:$0xff] %v343
    %360 = vst [vmem:[%s4 + $0x28] sm:$0xff] %v344
    %361 = vst [vmem:[%s4 + $0x30] sm:$0xff] %v345
    %362 = vst [vmem:[%s4 + $0x38] sm:$0xff] %v346
    %363 = vst [vmem:[%s4 + $0x40] sm:$0xff] %v347
    %364 = vst [vmem:[%s4 + $0x48] sm:$0xff] %v348
    %365 = vst [vmem:[%s4 + $0x50] sm:$0xff] %v349
    %366 = vst [vmem:[%s4 + $0x58] sm:$0xff] %v350
    %367 = vst [vmem:[%s4 + $0x60] sm:$0xff] %v351
    %368 = vst [vmem:[%s4 + $0x68] sm:$0xff] %v352
    %369 = vst [vmem:[%s4 + $0x70] sm:$0xff] %v353
    %370 = vst [vmem:[%s4 + $0x78] sm:$0xff] %v354
    // Predicated region
    $region14: #{lghrec_forward.7} parent=1 // pred_check
      _
    $region15: #{lghrec_forward.7} parent=1 // pred_check_branch
      %372 = sbr.rel (0) target = $region17
    $region16: #{lghrec_forward.7} parent=1 // pred_region
      %s374 = ssub.s32 1024, 1024
      %375 = vsyncadd [#allocation3], %s374
      %s376 = sshll.u32 [#allocation2], 4
      %s377 = int_to_ptr.vmem [resolvable:$true] %s376
      %382 = dma.vmem_to_hbm [thread:$0]  %s377, 1024, %s3, [#allocation3], 64, 64, 4
    $region17: #{lghrec_forward.7} parent=1 // pred_fallthru
      _
    // Predicated region
    $region18: #{lghrec_forward.7} parent=1 // pred_check
      _
    $region19: #{lghrec_forward.7} parent=1 // pred_check_branch
      %384 = sbr.rel (0) target = $region21
    $region20: #{lghrec_forward.7} parent=1 // pred_region
      _
    $region21: #{lghrec_forward.7} parent=1 // pred_fallthru
      _
    // Predicated region
    $region22: #{lghrec_forward.7} parent=1 // pred_check
      _
    $region23: #{lghrec_forward.7} parent=1 // pred_check_branch
      %386 = sbr.rel (0) target = $region25
    $region24: #{lghrec_forward.7} parent=1 // pred_region
      %387 = dma.done [#allocation3], 1024
    $region25: #{lghrec_forward.7} parent=1 // pred_fallthru
      _
    // Predicated region
    $region26: #{lghrec_forward.7} parent=1 // pred_check
      _
    $region27: #{lghrec_forward.7} parent=1 // pred_check_branch
      %389 = sbr.rel (0) target = $region29
    $region28: #{lghrec_forward.7} parent=1 // pred_region
      _
    $region29: #{lghrec_forward.7} parent=1 // pred_fallthru
      _
    %390 = vsyncpa [#allocation3], 1

// kernel: lghrec_forward.9
$region0: #{lghrec_forward.9}
  #allocation0 [shape = 'u32[]', space=smem, size = 0x4, offset = 0x4, fixed_abs, tag = 'smem constant byte address 0x4 - core index']
  #allocation1 [shape = 'u32[144,128]{1,0:T(1,128)}', space=vmem, size = 0x12000, scoped, tag = 'internal scratch']
  %s0 = inlined_call_operand.vmem [shape: f32[32,128], index: 0, kind: input, shape index: {}]
  %s1 = inlined_call_operand.vmem [shape: f32[32,128], index: 1, kind: input, shape index: {}]
  %s2 = inlined_call_operand.vmem [shape: f32[1,128], index: 2, kind: output, shape index: {}]
  %s3 = sld [smem:[#allocation0]]
  $region18: #{lghrec_forward.9} parent=0
    _
  %s5 = ssub.s32 1, %s3
  %s6 = scalar_select 0, %s5, %s3
  // Predicated region
  $region2: #{lghrec_forward.9} parent=0 // pred_check
    _
  $region3: #{lghrec_forward.9} parent=0 // pred_check_branch
    %8 = sbr.rel (0) target = $region5
  $region4: #{lghrec_forward.9} parent=0 // pred_region
    _
  $region5: #{lghrec_forward.9} parent=0 // pred_fallthru
    _
  // Predicated region
  $region6: #{lghrec_forward.9} parent=0 // pred_check
    _
  $region7: #{lghrec_forward.9} parent=0 // pred_check_branch
    %10 = sbr.rel (0) target = $region9
  $region8: #{lghrec_forward.9} parent=0 // pred_region
    _
  $region9: #{lghrec_forward.9} parent=0 // pred_fallthru
    _
  %v11 = vld [vmem:[%s0] sm:$0xff]
  %v12 = vld [vmem:[%s0 + $0x8] sm:$0xff]
  %v13 = vld [vmem:[%s0 + $0x10] sm:$0xff]
  %v14 = vld [vmem:[%s0 + $0x18] sm:$0xff]
  %v15 = vld [vmem:[%s1] sm:$0xff]
  %v16 = vld [vmem:[%s1 + $0x8] sm:$0xff]
  %v17 = vld [vmem:[%s1 + $0x10] sm:$0xff]
  %v18 = vld [vmem:[%s1 + $0x18] sm:$0xff]
  %v19 = vmul.f32 %v11, %v15
  %v20 = vmul.f32 %v12, %v16
  %v21 = vmul.f32 %v13, %v17
  %v22 = vmul.f32 %v14, %v18
  %v23 = vadd.f32 %v19, %v20
  %v24 = vadd.f32 %v23, %v21
  %v25 = vadd.f32 %v24, %v22
  %v26 = vrot.slane %v25, 4
  %v27 = vadd.f32 %v25, %v26
  %v28 = vrot.slane %v27, 2
  %v29 = vadd.f32 %v27, %v28
  %v30 = vrot.slane %v29, 1
  %v31 = vadd.f32 %v29, %v30
  %32 = vst [vmem:[%s2] sm:$0x1] %v31
  // Predicated region
  $region10: #{lghrec_forward.9} parent=0 // pred_check
    _
  $region11: #{lghrec_forward.9} parent=0 // pred_check_branch
    %34 = sbr.rel (0) target = $region13
  $region12: #{lghrec_forward.9} parent=0 // pred_region
    _
  $region13: #{lghrec_forward.9} parent=0 // pred_fallthru
    _
  // Predicated region
  $region14: #{lghrec_forward.9} parent=0 // pred_check
    _
  $region15: #{lghrec_forward.9} parent=0 // pred_check_branch
    %36 = sbr.rel (0) target = $region17
  $region16: #{lghrec_forward.9} parent=0 // pred_region
    _
  $region17: #{lghrec_forward.9} parent=0 // pred_fallthru
    _

</llo_original>
